<compile_context>
chip_gen: v7x
topology: tpu7x:2x2x1
jax: 0.10.0
libtpu: 0.0.40
codegen_flags: <defaults>
</compile_context>

<pallas_src>
import jax
import jax.numpy as jnp
from jax import lax
from jax.experimental import pallas as pl
from jax.experimental.pallas import tpu as pltpu


def _flash_residual_kernel(q_ref, k_ref, v_ref, wo_ref, b_ref, xres_ref, o_ref,
                           m_sc, l_sc, acc_sc, y_sc):
    # grid = (batch, q-tiles, heads, kv-tiles); heads & kv are sequential reductions
    h = pl.program_id(2)
    ki = pl.program_id(3)
    last_h = pl.num_programs(2) - 1
    last_k = pl.num_programs(3) - 1

    @pl.when((h == 0) & (ki == 0))
    def _init_output_acc():
        y_sc[...] = jnp.zeros_like(y_sc)

    @pl.when(ki == 0)
    def _init_head():
        m_sc[...] = jnp.full_like(m_sc, -jnp.inf)
        l_sc[...] = jnp.zeros_like(l_sc)
        acc_sc[...] = jnp.zeros_like(acc_sc)

    q = q_ref[0, 0]                       # (tq,  d) bf16, softmax scale pre-folded
    k = k_ref[0, 0]                       # (tkv, d) bf16
    v = v_ref[0, 0]                       # (tkv, d) bf16

    # scores: contract the head dim of q and k (no explicit transpose)
    s = lax.dot_general(q, k, (((1,), (1,)), ((), ())),
                        preferred_element_type=jnp.float32)       # (tq, tkv) f32

    m_prev = m_sc[...]
    m_new = jnp.maximum(m_prev, jnp.max(s, axis=-1, keepdims=True))
    alpha = jnp.exp(m_prev - m_new)
    p = jnp.exp(s - m_new)                                        # (tq, tkv) f32
    l_sc[...] = alpha * l_sc[...] + jnp.sum(p, axis=-1, keepdims=True)
    acc_sc[...] = alpha * acc_sc[...] + jnp.dot(
        p.astype(jnp.bfloat16), v, preferred_element_type=jnp.float32)
    m_sc[...] = m_new

    @pl.when(ki == last_k)
    def _finish_head():
        # exact normalization: once per head per q-tile, cost negligible
        out_h = acc_sc[...] / l_sc[...]                           # (tq, d) f32
        # y^T contribution of this head: (C8, d) x (tq, d) contracted on d -> (C8, tq)
        y_t = lax.dot_general(wo_ref[0], out_h, (((1,), (1,)), ((), ())),
                              preferred_element_type=jnp.float32)
        y_sc[...] = y_sc[...] + y_t

        @pl.when(h == last_h)
        def _store():
            # bias + residual (channels-on-sublanes, N on lanes -> unmasked stores)
            o_ref[0] = (y_sc[...] + b_ref[...]
                        + xres_ref[0].astype(jnp.float32)).astype(o_ref.dtype)


def residual_attention(x_nchw, w_qkv, w_out, b_out, *, heads=4, dim_head=32,
                       tq=256, tkv=256):
    """x_nchw: (B, C, H, W); w_qkv: (3*hidden, C, 1, 1); w_out: (C, hidden, 1, 1); b_out: (C,)."""
    B, C, H, W = x_nchw.shape
    N = H * W
    hidden = heads * dim_head
    assert w_qkv.shape[0] == 3 * hidden and w_out.shape[0] == C and w_out.shape[1] == hidden
    scale = dim_head ** (-0.5)

    tq = min(tq, N)
    tkv = min(tkv, N)
    assert N % tq == 0 and N % tkv == 0, "spatial size must tile evenly"
    assert (tq % 128 == 0 or tq == N) and (tkv % 8 == 0 or tkv == N), \
        "tiles must satisfy TPU (8,128) tiling for lane-dense residual/output blocks"

    # ---------- wrapper-side projections (wide XLA matmuls, done once) ----------
    x_flat = jnp.transpose(x_nchw, (0, 2, 3, 1)).reshape(B, N, C).astype(jnp.float32)
    w3 = w_qkv.reshape(3, hidden, C).astype(jnp.float32)

    def project(w):
        return jnp.einsum('bnc,oc->bno', x_flat, w, precision=lax.Precision.HIGHEST)

    q_all = project(w3[0]) * scale          # scale folded in f32 (matches reference)
    k_all = project(w3[1])
    v_all = project(w3[2])

    def to_heads(t):                        # (B, N, hidden) -> (B, heads, N, d) bf16
        return t.reshape(B, N, heads, dim_head).transpose(0, 2, 1, 3).astype(jnp.bfloat16)

    q, k, v = to_heads(q_all), to_heads(k_all), to_heads(v_all)

    # output projection weight per head: (heads, C8, d); channels padded to sublane mult of 8
    C8 = -(-C // 8) * 8
    wo = w_out.reshape(C, heads, dim_head).transpose(1, 0, 2).astype(jnp.float32)  # (h, C, d)
    wo = jnp.pad(wo, ((0, 0), (0, C8 - C), (0, 0)))
    bo = jnp.pad(b_out.astype(jnp.float32), (0, C8 - C)).reshape(C8, 1)

    # residual / output in channels-on-sublanes, N-on-lanes layout: (B, C8, N)
    x_cs = jnp.pad(x_nchw.reshape(B, C, N), ((0, 0), (0, C8 - C), (0, 0)))

    grid = (B, N // tq, heads, N // tkv)
    out_cs = pl.pallas_call(
        _flash_residual_kernel,
        out_shape=jax.ShapeDtypeStruct((B, C8, N), x_nchw.dtype),
        grid_spec=pltpu.PrefetchScalarGridSpec(
            num_scalar_prefetch=0,
            grid=grid,
            in_specs=[
                pl.BlockSpec((1, 1, tq, dim_head), lambda b, qi, h, ki: (b, h, qi, 0)),   # Q
                pl.BlockSpec((1, 1, tkv, dim_head), lambda b, qi, h, ki: (b, h, ki, 0)),  # K
                pl.BlockSpec((1, 1, tkv, dim_head), lambda b, qi, h, ki: (b, h, ki, 0)),  # V
                pl.BlockSpec((1, C8, dim_head), lambda b, qi, h, ki: (h, 0, 0)),          # Wo
                pl.BlockSpec((C8, 1), lambda b, qi, h, ki: (0, 0)),                       # bias
                pl.BlockSpec((1, C8, tq), lambda b, qi, h, ki: (b, 0, qi)),               # x residual
            ],
            out_specs=pl.BlockSpec((1, C8, tq), lambda b, qi, h, ki: (b, 0, qi)),
            scratch_shapes=[
                pltpu.VMEM((tq, 1), jnp.float32),          # running max
                pltpu.VMEM((tq, 1), jnp.float32),          # running sum
                pltpu.VMEM((tq, dim_head), jnp.float32),   # un-normalized head output
                pltpu.VMEM((C8, tq), jnp.float32),         # projected output accumulator
            ]),
        compiler_params=pltpu.CompilerParams(
            dimension_semantics=("parallel", "parallel", "arbitrary", "arbitrary"),
            vmem_limit_bytes=32 * 1024 * 1024),
    )(q, k, v, wo, bo, x_cs)

    # drop channel padding, back to NCHW
    return out_cs[:, :C, :].reshape(B, C, H, W)


def residual_attention_reference(x, w_qkv, w_out, b_out, *, heads=4, dim_head=32):
    """Pure-JAX replica of the PyTorch Residual(Attention) forward (NCHW)."""
    B, C, H, W = x.shape
    hidden = heads * dim_head
    scale = dim_head ** (-0.5)
    qkv = jnp.einsum('oc,bchw->bohw', w_qkv.reshape(3 * hidden, C), x,
                     precision=lax.Precision.HIGHEST)
    q, k, v = jnp.split(qkv, 3, axis=1)
    rearr = lambda t: t.reshape(B, heads, dim_head, H * W)
    q, k, v = map(rearr, (q, k, v))
    q = q * scale
    sim = jnp.einsum('bhdi,bhdj->bhij', q, k, precision=lax.Precision.HIGHEST)
    sim = sim - jnp.max(sim, axis=-1, keepdims=True)
    attn = jax.nn.softmax(sim, axis=-1)
    out = jnp.einsum('bhij,bhdj->bhid', attn, v, precision=lax.Precision.HIGHEST)
    out = out.reshape(B, heads, H, W, dim_head).transpose(0, 1, 4, 2, 3).reshape(B, hidden, H, W)
    y = jnp.einsum('oc,bchw->bohw', w_out.reshape(C, hidden), out,
                   precision=lax.Precision.HIGHEST) + b_out.reshape(1, C, 1, 1)
    return y + x   # Residual: fn(x) + x


if __name__ == "__main__":
    B, C, H, W = 2, 4, 16, 16
    heads, dim_head = 4, 32
    hidden = heads * dim_head

    key = jax.random.PRNGKey(0)
    kx, kq, ko, kb = jax.random.split(key, 4)

    x = jax.random.normal(kx, (B, C, H, W), dtype=jnp.float32)
    # deterministic synthetic params (Conv2d 1x1 weight shapes from the Unet __init__)
    w_qkv = jax.random.normal(kq, (3 * hidden, C, 1, 1), dtype=jnp.float32) / jnp.sqrt(C)
    w_out = jax.random.normal(ko, (C, hidden, 1, 1), dtype=jnp.float32) / jnp.sqrt(hidden)
    b_out = jax.random.normal(kb, (C,), dtype=jnp.float32) * 0.01

    y = residual_attention(x, w_qkv, w_out, b_out, heads=heads, dim_head=dim_head)
    y = jax.block_until_ready(y)

    y_ref = residual_attention_reference(x, w_qkv, w_out, b_out,
                                         heads=heads, dim_head=dim_head)
    assert y.shape == (B, C, H, W)
    err = jnp.max(jnp.abs(y - y_ref))
    assert jnp.allclose(y, y_ref, atol=2e-2, rtol=2e-2), f"mismatch vs reference: {err}"

    print("KERNEL_OK")
</pallas_src>

<mosaic_0001>
module attributes {stable_mosaic.version = 11 : i64} {
  func.func @_flash_residual_kernel(%arg0: i32, %arg1: i32, %arg2: i32, %arg3: i32, %arg4: memref<1x1x256x32xbf16, #tpu.memory_space<vmem>>, %arg5: memref<1x1x256x32xbf16, #tpu.memory_space<vmem>>, %arg6: memref<1x1x256x32xbf16, #tpu.memory_space<vmem>>, %arg7: memref<1x8x32xf32, #tpu.memory_space<vmem>>, %arg8: memref<8x1xf32, #tpu.memory_space<vmem>>, %arg9: memref<1x8x256xf32, #tpu.memory_space<vmem>>, %arg10: memref<1x8x256xf32, #tpu.memory_space<vmem>>, %arg11: memref<256x1xf32, #tpu.memory_space<vmem>>, %arg12: memref<256x1xf32, #tpu.memory_space<vmem>>, %arg13: memref<256x32xf32, #tpu.memory_space<vmem>>, %arg14: memref<8x256xf32, #tpu.memory_space<vmem>>) attributes {dimension_semantics = [#tpu.dimension_semantics<parallel>, #tpu.dimension_semantics<parallel>, #tpu.dimension_semantics<arbitrary>, #tpu.dimension_semantics<arbitrary>], iteration_bounds = array<i64: 2, 1, 4, 1>, scalar_prefetch = 0 : i64, scratch_operands = 4 : i64, tpu.core_type = #tpu.core_type<tc>, window_params = [{transform_indices = @transform_0, window_bounds = array<i64: 1, 1, 256, 32>}, {transform_indices = @transform_1, window_bounds = array<i64: 1, 1, 256, 32>}, {transform_indices = @transform_2, window_bounds = array<i64: 1, 1, 256, 32>}, {transform_indices = @transform_3, window_bounds = array<i64: 1, 8, 32>}, {pipeline_mode = #tpu.pipeline_mode<synchronous>, transform_indices = @transform_4, window_bounds = array<i64: 8, 1>}, {transform_indices = @transform_5, window_bounds = array<i64: 1, 8, 256>}, {transform_indices = @transform_6, window_bounds = array<i64: 1, 8, 256>}]} {
    %c0_i32 = arith.constant 0 : i32
    %0 = arith.cmpi eq, %arg2, %c0_i32 : i32
    %c0_i32_0 = arith.constant 0 : i32
    %1 = arith.cmpi eq, %arg3, %c0_i32_0 : i32
    %2 = arith.andi %0, %1 : i1
    %3 = arith.extui %2 : i1 to i32
    %c0_i32_1 = arith.constant 0 : i32
    %4 = arith.cmpi ne, %3, %c0_i32_1 : i32
    scf.if %4 {
      %cst_32 = arith.constant 0.000000e+00 : f32
      %41 = vector.broadcast %cst_32 : f32 to vector<8x256xf32>
      %c0_33 = arith.constant 0 : index
      %c0_34 = arith.constant 0 : index
      %42 = vector.load %arg14[%c0_33, %c0_34] : memref<8x256xf32, #tpu.memory_space<vmem>>, vector<8x256xf32>
      tpu.vector_store %arg14[%c0_33, %c0_34], %41 {strides = array<i32>} : memref<8x256xf32, #tpu.memory_space<vmem>>, vector<8x256xf32>,
    } else {
    }
    %c0_i32_2 = arith.constant 0 : i32
    %5 = arith.cmpi eq, %arg3, %c0_i32_2 : i32
    %6 = arith.extui %5 : i1 to i32
    %c0_i32_3 = arith.constant 0 : i32
    %7 = arith.cmpi ne, %6, %c0_i32_3 : i32
    scf.if %7 {
      %cst_32 = arith.constant 0xFF800000 : f32
      %41 = vector.broadcast %cst_32 : f32 to vector<256x1xf32>
      %c0_33 = arith.constant 0 : index
      %c0_34 = arith.constant 0 : index
      %42 = vector.load %arg11[%c0_33, %c0_34] : memref<256x1xf32, #tpu.memory_space<vmem>>, vector<256x1xf32>
      tpu.vector_store %arg11[%c0_33, %c0_34], %41 {strides = array<i32>} : memref<256x1xf32, #tpu.memory_space<vmem>>, vector<256x1xf32>,
      %cst_35 = arith.constant 0.000000e+00 : f32
      %43 = vector.broadcast %cst_35 : f32 to vector<256x1xf32>
      %c0_36 = arith.constant 0 : index
      %c0_37 = arith.constant 0 : index
      %44 = vector.load %arg12[%c0_36, %c0_37] : memref<256x1xf32, #tpu.memory_space<vmem>>, vector<256x1xf32>
      tpu.vector_store %arg12[%c0_36, %c0_37], %43 {strides = array<i32>} : memref<256x1xf32, #tpu.memory_space<vmem>>, vector<256x1xf32>,
      %cst_38 = arith.constant 0.000000e+00 : f32
      %45 = vector.broadcast %cst_38 : f32 to vector<256x32xf32>
      %c0_39 = arith.constant 0 : index
      %c0_40 = arith.constant 0 : index
      %46 = vector.load %arg13[%c0_39, %c0_40] : memref<256x32xf32, #tpu.memory_space<vmem>>, vector<256x32xf32>
      tpu.vector_store %arg13[%c0_39, %c0_40], %45 {strides = array<i32>} : memref<256x32xf32, #tpu.memory_space<vmem>>, vector<256x32xf32>,
    } else {
    }
    %c0 = arith.constant 0 : index
    %c0_4 = arith.constant 0 : index
    %c0_5 = arith.constant 0 : index
    %c0_6 = arith.constant 0 : index
    %8 = vector.load %arg4[%c0, %c0_4, %c0_5, %c0_6] : memref<1x1x256x32xbf16, #tpu.memory_space<vmem>>, vector<1x1x256x32xbf16>
    %9 = vector.shape_cast %8 : vector<1x1x256x32xbf16> to vector<256x32xbf16>
    %c0_7 = arith.constant 0 : index
    %c0_8 = arith.constant 0 : index
    %c0_9 = arith.constant 0 : index
    %c0_10 = arith.constant 0 : index
    %10 = vector.load %arg5[%c0_7, %c0_8, %c0_9, %c0_10] : memref<1x1x256x32xbf16, #tpu.memory_space<vmem>>, vector<1x1x256x32xbf16>
    %11 = vector.shape_cast %10 : vector<1x1x256x32xbf16> to vector<256x32xbf16>
    %c0_11 = arith.constant 0 : index
    %c0_12 = arith.constant 0 : index
    %c0_13 = arith.constant 0 : index
    %c0_14 = arith.constant 0 : index
    %12 = vector.load %arg6[%c0_11, %c0_12, %c0_13, %c0_14] : memref<1x1x256x32xbf16, #tpu.memory_space<vmem>>, vector<1x1x256x32xbf16>
    %13 = vector.shape_cast %12 : vector<1x1x256x32xbf16> to vector<256x32xbf16>
    %cst = arith.constant dense<0.000000e+00> : vector<256x256xf32>
    %14 = tpu.matmul %9, %11, %cst {dimension_numbers = #tpu.dot_dimension_numbers<[1], [1], [0], [0], [0, 0, 1, 0], [], []>} : vector<256x32xbf16>, vector<256x32xbf16>, vector<256x256xf32> -> vector<256x256xf32>
    %c0_15 = arith.constant 0 : index
    %c0_16 = arith.constant 0 : index
    %15 = vector.load %arg11[%c0_15, %c0_16] : memref<256x1xf32, #tpu.memory_space<vmem>>, vector<256x1xf32>
    %cst_17 = arith.constant dense<0xFF800000> : vector<256xf32>
    %16 = vector.multi_reduction <maximumf>, %14, %cst_17 [1] : vector<256x256xf32> to vector<256xf32>
    %17 = vector.shape_cast %16 : vector<256xf32> to vector<256x1xf32>
    %18 = arith.maximumf %15, %17 : vector<256x1xf32>
    %19 = arith.subf %15, %18 : vector<256x1xf32>
    %20 = math.exp %19 : vector<256x1xf32>
    %21 = vector.broadcast %18 : vector<256x1xf32> to vector<256x256xf32>
    %22 = arith.subf %14, %21 : vector<256x256xf32>
    %23 = math.exp %22 : vector<256x256xf32>
    %c0_18 = arith.constant 0 : index
    %c0_19 = arith.constant 0 : index
    %24 = vector.load %arg12[%c0_18, %c0_19] : memref<256x1xf32, #tpu.memory_space<vmem>>, vector<256x1xf32>
    %25 = arith.mulf %20, %24 : vector<256x1xf32>
    %cst_20 = arith.constant dense<0.000000e+00> : vector<256xf32>
    %26 = vector.multi_reduction <add>, %23, %cst_20 [1] : vector<256x256xf32> to vector<256xf32>
    %27 = vector.shape_cast %26 : vector<256xf32> to vector<256x1xf32>
    %28 = arith.addf %25, %27 : vector<256x1xf32>
    %c0_21 = arith.constant 0 : index
    %c0_22 = arith.constant 0 : index
    %29 = vector.load %arg12[%c0_21, %c0_22] : memref<256x1xf32, #tpu.memory_space<vmem>>, vector<256x1xf32>
    tpu.vector_store %arg12[%c0_21, %c0_22], %28 {strides = array<i32>} : memref<256x1xf32, #tpu.memory_space<vmem>>, vector<256x1xf32>,
    %c0_23 = arith.constant 0 : index
    %c0_24 = arith.constant 0 : index
    %30 = vector.load %arg13[%c0_23, %c0_24] : memref<256x32xf32, #tpu.memory_space<vmem>>, vector<256x32xf32>
    %31 = vector.broadcast %20 : vector<256x1xf32> to vector<256x32xf32>
    %32 = arith.mulf %31, %30 : vector<256x32xf32>
    %33 = arith.truncf %23 : vector<256x256xf32> to vector<256x256xbf16>
    %cst_25 = arith.constant dense<0.000000e+00> : vector<256x32xf32>
    %34 = tpu.matmul %33, %13, %cst_25 {dimension_numbers = #tpu.dot_dimension_numbers<[1], [0], [0], [1], [0, 0, 1, 1], [], []>} : vector<256x256xbf16>, vector<256x32xbf16>, vector<256x32xf32> -> vector<256x32xf32>
    %35 = arith.addf %32, %34 : vector<256x32xf32>
    %c0_26 = arith.constant 0 : index
    %c0_27 = arith.constant 0 : index
    %36 = vector.load %arg13[%c0_26, %c0_27] : memref<256x32xf32, #tpu.memory_space<vmem>>, vector<256x32xf32>
    tpu.vector_store %arg13[%c0_26, %c0_27], %35 {strides = array<i32>} : memref<256x32xf32, #tpu.memory_space<vmem>>, vector<256x32xf32>,
    %c0_28 = arith.constant 0 : index
    %c0_29 = arith.constant 0 : index
    %37 = vector.load %arg11[%c0_28, %c0_29] : memref<256x1xf32, #tpu.memory_space<vmem>>, vector<256x1xf32>
    tpu.vector_store %arg11[%c0_28, %c0_29], %18 {strides = array<i32>} : memref<256x1xf32, #tpu.memory_space<vmem>>, vector<256x1xf32>,
    %c0_i32_30 = arith.constant 0 : i32
    %38 = arith.cmpi eq, %arg3, %c0_i32_30 : i32
    %39 = arith.extui %38 : i1 to i32
    %c0_i32_31 = arith.constant 0 : i32
    %40 = arith.cmpi ne, %39, %c0_i32_31 : i32
    scf.if %40 {
      %c0_32 = arith.constant 0 : index
      %c0_33 = arith.constant 0 : index
      %41 = vector.load %arg13[%c0_32, %c0_33] : memref<256x32xf32, #tpu.memory_space<vmem>>, vector<256x32xf32>
      %c0_34 = arith.constant 0 : index
      %c0_35 = arith.constant 0 : index
      %42 = vector.load %arg12[%c0_34, %c0_35] : memref<256x1xf32, #tpu.memory_space<vmem>>, vector<256x1xf32>
      %43 = vector.broadcast %42 : vector<256x1xf32> to vector<256x32xf32>
      %44 = arith.divf %41, %43 : vector<256x32xf32>
      %c0_36 = arith.constant 0 : index
      %c0_37 = arith.constant 0 : index
      %c0_38 = arith.constant 0 : index
      %45 = vector.load %arg7[%c0_36, %c0_37, %c0_38] : memref<1x8x32xf32, #tpu.memory_space<vmem>>, vector<1x8x32xf32>
      %46 = vector.shape_cast %45 : vector<1x8x32xf32> to vector<8x32xf32>
      %cst_39 = arith.constant dense<0.000000e+00> : vector<8x256xf32>
      %47 = tpu.matmul %46, %44, %cst_39 {dimension_numbers = #tpu.dot_dimension_numbers<[1], [1], [0], [0], [0, 0, 1, 0], [], []>} : vector<8x32xf32>, vector<256x32xf32>, vector<8x256xf32> -> vector<8x256xf32>
      %c0_40 = arith.constant 0 : index
      %c0_41 = arith.constant 0 : index
      %48 = vector.load %arg14[%c0_40, %c0_41] : memref<8x256xf32, #tpu.memory_space<vmem>>, vector<8x256xf32>
      %49 = arith.addf %48, %47 : vector<8x256xf32>
      %c0_42 = arith.constant 0 : index
      %c0_43 = arith.constant 0 : index
      %50 = vector.load %arg14[%c0_42, %c0_43] : memref<8x256xf32, #tpu.memory_space<vmem>>, vector<8x256xf32>
      tpu.vector_store %arg14[%c0_42, %c0_43], %49 {strides = array<i32>} : memref<8x256xf32, #tpu.memory_space<vmem>>, vector<8x256xf32>,
      %c3_i32 = arith.constant 3 : i32
      %51 = arith.cmpi eq, %arg2, %c3_i32 : i32
      %52 = arith.extui %51 : i1 to i32
      %c0_i32_44 = arith.constant 0 : i32
      %53 = arith.cmpi ne, %52, %c0_i32_44 : i32
      scf.if %53 {
        %c0_45 = arith.constant 0 : index
        %c0_46 = arith.constant 0 : index
        %54 = vector.load %arg14[%c0_45, %c0_46] : memref<8x256xf32, #tpu.memory_space<vmem>>, vector<8x256xf32>
        %c0_47 = arith.constant 0 : index
        %c0_48 = arith.constant 0 : index
        %55 = vector.load %arg8[%c0_47, %c0_48] : memref<8x1xf32, #tpu.memory_space<vmem>>, vector<8x1xf32>
        %56 = vector.broadcast %55 : vector<8x1xf32> to vector<8x256xf32>
        %57 = arith.addf %54, %56 : vector<8x256xf32>
        %c0_49 = arith.constant 0 : index
        %c0_50 = arith.constant 0 : index
        %c0_51 = arith.constant 0 : index
        %58 = vector.load %arg9[%c0_49, %c0_50, %c0_51] : memref<1x8x256xf32, #tpu.memory_space<vmem>>, vector<1x8x256xf32>
        %59 = vector.shape_cast %58 : vector<1x8x256xf32> to vector<8x256xf32>
        %60 = arith.addf %57, %59 : vector<8x256xf32>
        %c0_52 = arith.constant 0 : index
        %c0_53 = arith.constant 0 : index
        %c0_54 = arith.constant 0 : index
        %61 = vector.load %arg10[%c0_52, %c0_53, %c0_54] : memref<1x8x256xf32, #tpu.memory_space<vmem>>, vector<1x8x256xf32>
        %62 = vector.shape_cast %61 : vector<1x8x256xf32> to vector<8x256xf32>
        %63 = vector.shape_cast %60 : vector<8x256xf32> to vector<1x8x256xf32>
        tpu.vector_store %arg10[%c0_52, %c0_53, %c0_54], %63 {strides = array<i32>} : memref<1x8x256xf32, #tpu.memory_space<vmem>>, vector<1x8x256xf32>,
      } else {
      }
    } else {
    }
    return
  }
  func.func @transform_0(%arg0: i32, %arg1: i32, %arg2: i32, %arg3: i32) -> (i32, i32, i32, i32) {
    %c0_i32 = arith.constant 0 : i32
    %c0_i32_0 = arith.constant 0 : i32
    return %arg0, %arg2, %arg1, %c0_i32 : i32, i32, i32, i32
  }
  func.func @transform_1(%arg0: i32, %arg1: i32, %arg2: i32, %arg3: i32) -> (i32, i32, i32, i32) {
    %c0_i32 = arith.constant 0 : i32
    %c0_i32_0 = arith.constant 0 : i32
    return %arg0, %arg2, %arg3, %c0_i32 : i32, i32, i32, i32
  }
  func.func @transform_2(%arg0: i32, %arg1: i32, %arg2: i32, %arg3: i32) -> (i32, i32, i32, i32) {
    %c0_i32 = arith.constant 0 : i32
    %c0_i32_0 = arith.constant 0 : i32
    return %arg0, %arg2, %arg3, %c0_i32 : i32, i32, i32, i32
  }
  func.func @transform_3(%arg0: i32, %arg1: i32, %arg2: i32, %arg3: i32) -> (i32, i32, i32) {
    %c0_i32 = arith.constant 0 : i32
    %c0_i32_0 = arith.constant 0 : i32
    %c0_i32_1 = arith.constant 0 : i32
    return %arg2, %c0_i32, %c0_i32_0 : i32, i32, i32
  }
  func.func @transform_4(%arg0: i32, %arg1: i32, %arg2: i32, %arg3: i32) -> (i32, i32) {
    %c0_i32 = arith.constant 0 : i32
    %c0_i32_0 = arith.constant 0 : i32
    %c0_i32_1 = arith.constant 0 : i32
    return %c0_i32, %c0_i32_0 : i32, i32
  }
  func.func @transform_5(%arg0: i32, %arg1: i32, %arg2: i32, %arg3: i32) -> (i32, i32, i32) {
    %c0_i32 = arith.constant 0 : i32
    %c0_i32_0 = arith.constant 0 : i32
    return %arg0, %c0_i32, %arg1 : i32, i32, i32
  }
  func.func @transform_6(%arg0: i32, %arg1: i32, %arg2: i32, %arg3: i32) -> (i32, i32, i32) {
    %c0_i32 = arith.constant 0 : i32
    %c0_i32_0 = arith.constant 0 : i32
    return %arg0, %c0_i32, %arg1 : i32, i32, i32
  }
}

</mosaic_0001>

<llo_original>
// kernel: tpu_custom_call.1
$region0: #{tpu_custom_call.1}
  #allocation0 [shape = 'u32[]', space=smem, size = 0x4, offset = 0x4, fixed_abs, tag = 'smem constant byte address 0x4 - core index']
  #allocation1 [shape = 'u32[144,128]{1,0:T(1,128)}', space=vmem, size = 0x12000, scoped, tag = 'internal scratch']
  #allocation2 [shape = 'f32[256,1]{1,0:T(8,128)}', space=vmem, size = 0x20000, scoped, tag = 'scratch operand']
  #allocation3 [shape = 'f32[256,1]{1,0:T(8,128)}', space=vmem, size = 0x20000, scoped, tag = 'scratch operand']
  #allocation4 [shape = 'f32[256,32]{1,0:T(8,128)}', space=vmem, size = 0x20000, scoped, tag = 'scratch operand']
  #allocation5 [shape = 'f32[8,256]{1,0:T(8,128)}', space=vmem, size = 0x2000, scoped, tag = 'scratch operand']
  %s0 = inlined_call_operand.vmem [shape: bf16[2,4,256,32], index: 0, kind: input, shape index: {}]
  %s1 = inlined_call_operand.vmem [shape: bf16[2,4,256,32], index: 1, kind: input, shape index: {}]
  %s2 = inlined_call_operand.vmem [shape: bf16[2,4,256,32], index: 2, kind: input, shape index: {}]
  %s3 = inlined_call_operand.vmem [shape: f32[4,8,32], index: 3, kind: input, shape index: {}]
  %s4 = inlined_call_operand.vmem [shape: f32[8,1], index: 4, kind: input, shape index: {}]
  %s5 = inlined_call_operand.vmem [shape: f32[2,8,256], index: 5, kind: input, shape index: {}]
  %s6 = inlined_call_operand.hbm [shape: f32[2,8,256], index: 6, kind: output, shape index: {}]
  %s7 = sld [smem:[#allocation0]]
  $region73: #{tpu_custom_call.1} parent=0
    _
  %s9 = ssub.s32 1, %s7
  %s10 = scalar_select 0, %s9, %s7
  $region1: #{tpu_custom_call.1} parent=0
    #allocation6 [shape = 'u8[16384]{0}', space=vmem, size = 0x4000, scoped, tag = 'output window, operand 0']
    #allocation7 [shape = 's32[2]{0}', space=sflag, size = 0x8, scoped, tag = 'scoped memory for tpu_custom_call.1']
    %11 = vsyncpa [#allocation7], 0
    %s12 = scalar_lea.sflag [#allocation7], 1
    %13 = vsyncpa %s12, 0
    loop: start=0, step=1, limit=10
    $region2: #{tpu_custom_call.1} parent=1 // loop_pre_header
      _
    $region3: #{tpu_custom_call.1} parent=1 // loop_header
      %s15 = sphi 0, %s19
      %p16 = scmp.ge.s32.totalorder %s15, 10
      %s22 = sphi 0, %s48
      %s23 = sphi 0, %s44
      %s24 = sphi 0, %s40
      %s25 = sphi 0, %s36
      %s26 = sphi 0, %s22
      %s27 = sphi 0, %s23
      %s28 = sphi 0, %s24
      %s29 = sphi 0, %s25
      %s30 = sphi 0, %s26
      %s31 = sphi 0, %s27
      %s32 = sphi 0, %s28
      %s33 = sphi 0, %s29
      %s55 = sphi 0, %s57
      %s58 = sphi 0, %s55
      %s59 = sphi 0, %s58
      %s75 = sphi 0, %s59
      %s85 = sphi 0, %s87
      %s88 = sphi 0, %s85
      %s89 = sphi 0, %s88
      %s105 = sphi 0, %s89
      %s115 = sphi 0, %s117
      %s118 = sphi 0, %s115
      %s119 = sphi 0, %s118
      %s135 = sphi 0, %s119
      %s141 = sphi 0, %s143
      %s144 = sphi 0, %s141
      %s145 = sphi 0, %s144
      %s161 = sphi 0, %s145
      %s165 = sphi 0, %s165
      %s167 = sphi 0, %s165
      %s168 = sphi 0, %s167
      %s182 = sphi 0, %s168
      %s190 = sphi 0, %s192
      %s193 = sphi 0, %s190
      %s194 = sphi 0, %s193
      %s210 = sphi 0, %s194
      %s218 = sphi 0, %s220
      %s221 = sphi 0, %s218
      %s222 = sphi 0, %s221
      %s238 = sphi 0, %s222
    $region4: #{tpu_custom_call.1} parent=1 // loop_header_branch
      %18 = sbr.rel (%p16) target = $region8
    $region5: #{tpu_custom_call.1} parent=1 // loop_body
      %s20 = ssub.s32 %s15, 1
      %s21 = ssub.s32 %s15, 2
      %s34 = sadd.s32 1, %s25
      %p35 = scmp.ge.s32.totalorder %s34, 1
      %s36 = scalar_select %p35, 0, %s34
      %s37 = sadd.s32 1, %s24
      %s38 = scalar_select %p35, %s37, %s24
      %p39 = scmp.ge.s32.totalorder %s38, 4
      %s40 = scalar_select %p39, 0, %s38
      %s41 = sadd.s32 1, %s23
      %s42 = scalar_select %p39, %s41, %s23
      %p43 = scmp.ge.s32.totalorder %s42, 1
      %s44 = scalar_select %p43, 0, %s42
      %s45 = sadd.s32 1, %s22
      %s46 = scalar_select %p43, %s45, %s22
      %p47 = scmp.ge.s32.totalorder %s46, 2
      %s48 = scalar_select %p47, 0, %s46
      %s49 = ssub.s32 %s22, %s48
      %s50 = ssub.s32 %s24, %s40
      %s51 = sor.u32 %s49, %s50
      %s52 = ssub.s32 %s23, %s44
      %s53 = sor.u32 %s51, %s52
      %p54 = scmp.eq.s32.totalorder %s53, 0
      %s56 = sadd.s32 %s55, 1
      %s57 = scalar_select %p54, %s55, %s56
      %p60 = pneg %p54
      %p61 = scmp.eq.s32.totalorder %s15, 7
      %p62 = por %p60, %p61
      %p63 = scmp.ne.s32.totalorder %s55, %s58
      %p64 = scmp.eq.s32.totalorder %s15, 0
      %p65 = por %p63, %p64
      %p66 = scmp.ne.s32.totalorder %s55, %s58
      %p67 = scmp.eq.s32.totalorder %s20, 7
      %p68 = por %p66, %p67
      %p69 = scmp.ne.s32.totalorder %s58, %s59
      %p70 = scmp.eq.s32.totalorder %s20, 0
      %p71 = por %p69, %p70
      %p72 = scmp.ne.s32.totalorder %s58, %s59
      %p73 = scmp.eq.s32.totalorder %s21, 7
      %p74 = por %p72, %p73
      %p76 = scmp.ne.s32.totalorder %s59, %s75
      %p77 = scmp.eq.s32.totalorder %s21, 0
      %p78 = por %p76, %p77
      %s79 = ssub.s32 %s22, %s48
      %s80 = ssub.s32 %s24, %s40
      %s81 = sor.u32 %s79, %s80
      %s82 = ssub.s32 %s25, %s36
      %s83 = sor.u32 %s81, %s82
      %p84 = scmp.eq.s32.totalorder %s83, 0
      %s86 = sadd.s32 %s85, 1
      %s87 = scalar_select %p84, %s85, %s86
      %p90 = pneg %p84
      %p91 = scmp.eq.s32.totalorder %s15, 7
      %p92 = por %p90, %p91
      %p93 = scmp.ne.s32.totalorder %s85, %s88
      %p94 = scmp.eq.s32.totalorder %s15, 0
      %p95 = por %p93, %p94
      %p96 = scmp.ne.s32.totalorder %s85, %s88
      %p97 = scmp.eq.s32.totalorder %s20, 7
      %p98 = por %p96, %p97
      %p99 = scmp.ne.s32.totalorder %s88, %s89
      %p100 = scmp.eq.s32.totalorder %s20, 0
      %p101 = por %p99, %p100
      %p102 = scmp.ne.s32.totalorder %s88, %s89
      %p103 = scmp.eq.s32.totalorder %s21, 7
      %p104 = por %p102, %p103
      %p106 = scmp.ne.s32.totalorder %s89, %s105
      %p107 = scmp.eq.s32.totalorder %s21, 0
      %p108 = por %p106, %p107
      %s109 = ssub.s32 %s22, %s48
      %s110 = ssub.s32 %s24, %s40
      %s111 = sor.u32 %s109, %s110
      %s112 = ssub.s32 %s25, %s36
      %s113 = sor.u32 %s111, %s112
      %p114 = scmp.eq.s32.totalorder %s113, 0
      %s116 = sadd.s32 %s115, 1
      %s117 = scalar_select %p114, %s115, %s116
      %p120 = pneg %p114
      %p121 = scmp.eq.s32.totalorder %s15, 7
      %p122 = por %p120, %p121
      %p123 = scmp.ne.s32.totalorder %s115, %s118
      %p124 = scmp.eq.s32.totalorder %s15, 0
      %p125 = por %p123, %p124
      %p126 = scmp.ne.s32.totalorder %s115, %s118
      %p127 = scmp.eq.s32.totalorder %s20, 7
      %p128 = por %p126, %p127
      %p129 = scmp.ne.s32.totalorder %s118, %s119
      %p130 = scmp.eq.s32.totalorder %s20, 0
      %p131 = por %p129, %p130
      %p132 = scmp.ne.s32.totalorder %s118, %s119
      %p133 = scmp.eq.s32.totalorder %s21, 7
      %p134 = por %p132, %p133
      %p136 = scmp.ne.s32.totalorder %s119, %s135
      %p137 = scmp.eq.s32.totalorder %s21, 0
      %p138 = por %p136, %p137
      %s139 = ssub.s32 %s24, %s40
      %p140 = scmp.eq.s32.totalorder %s139, 0
      %s142 = sadd.s32 %s141, 1
      %s143 = scalar_select %p140, %s141, %s142
      %p146 = pneg %p140
      %p147 = scmp.eq.s32.totalorder %s15, 7
      %p148 = por %p146, %p147
      %p149 = scmp.ne.s32.totalorder %s141, %s144
      %p150 = scmp.eq.s32.totalorder %s15, 0
      %p151 = por %p149, %p150
      %p152 = scmp.ne.s32.totalorder %s141, %s144
      %p153 = scmp.eq.s32.totalorder %s20, 7
      %p154 = por %p152, %p153
      %p155 = scmp.ne.s32.totalorder %s144, %s145
      %p156 = scmp.eq.s32.totalorder %s20, 0
      %p157 = por %p155, %p156
      %p158 = scmp.ne.s32.totalorder %s144, %s145
      %p159 = scmp.eq.s32.totalorder %s21, 7
      %p160 = por %p158, %p159
      %p162 = scmp.ne.s32.totalorder %s145, %s161
      %p163 = scmp.eq.s32.totalorder %s21, 0
      %p164 = por %p162, %p163
      %s166 = sadd.s32 %s165, 1
      %p169 = scmp.eq.s32.totalorder %s15, 7
      %p170 = scmp.ne.s32.totalorder %s165, %s167
      %p171 = scmp.eq.s32.totalorder %s15, 0
      %p172 = por %p170, %p171
      %p173 = scmp.ne.s32.totalorder %s165, %s167
      %p174 = scmp.eq.s32.totalorder %s20, 7
      %p175 = por %p173, %p174
      %p176 = scmp.ne.s32.totalorder %s167, %s168
      %p177 = scmp.eq.s32.totalorder %s20, 0
      %p178 = por %p176, %p177
      %p179 = scmp.ne.s32.totalorder %s167, %s168
      %p180 = scmp.eq.s32.totalorder %s21, 7
      %p181 = por %p179, %p180
      %p183 = scmp.ne.s32.totalorder %s168, %s182
      %p184 = scmp.eq.s32.totalorder %s21, 0
      %p185 = por %p183, %p184
      %s186 = ssub.s32 %s22, %s48
      %s187 = ssub.s32 %s23, %s44
      %s188 = sor.u32 %s186, %s187
      %p189 = scmp.eq.s32.totalorder %s188, 0
      %s191 = sadd.s32 %s190, 1
      %s192 = scalar_select %p189, %s190, %s191
      %p195 = pneg %p189
      %p196 = scmp.eq.s32.totalorder %s15, 7
      %p197 = por %p195, %p196
      %p198 = scmp.ne.s32.totalorder %s190, %s193
      %p199 = scmp.eq.s32.totalorder %s15, 0
      %p200 = por %p198, %p199
      %p201 = scmp.ne.s32.totalorder %s190, %s193
      %p202 = scmp.eq.s32.totalorder %s20, 7
      %p203 = por %p201, %p202
      %p204 = scmp.ne.s32.totalorder %s193, %s194
      %p205 = scmp.eq.s32.totalorder %s20, 0
      %p206 = por %p204, %p205
      %p207 = scmp.ne.s32.totalorder %s193, %s194
      %p208 = scmp.eq.s32.totalorder %s21, 7
      %p209 = por %p207, %p208
      %p211 = scmp.ne.s32.totalorder %s194, %s210
      %p212 = scmp.eq.s32.totalorder %s21, 0
      %p213 = por %p211, %p212
      %s214 = ssub.s32 %s22, %s48
      %s215 = ssub.s32 %s23, %s44
      %s216 = sor.u32 %s214, %s215
      %p217 = scmp.eq.s32.totalorder %s216, 0
      %s219 = sadd.s32 %s218, 1
      %s220 = scalar_select %p217, %s218, %s219
      %p223 = pneg %p217
      %p224 = scmp.eq.s32.totalorder %s15, 7
      %p225 = por %p223, %p224
      %p226 = scmp.ne.s32.totalorder %s218, %s221
      %p227 = scmp.eq.s32.totalorder %s15, 0
      %p228 = por %p226, %p227
      %p229 = scmp.ne.s32.totalorder %s218, %s221
      %p230 = scmp.eq.s32.totalorder %s20, 7
      %p231 = por %p229, %p230
      %p232 = scmp.ne.s32.totalorder %s221, %s222
      %p233 = scmp.eq.s32.totalorder %s20, 0
      %p234 = por %p232, %p233
      %p235 = scmp.ne.s32.totalorder %s221, %s222
      %p236 = scmp.eq.s32.totalorder %s21, 7
      %p237 = por %p235, %p236
      %p239 = scmp.ne.s32.totalorder %s222, %s238
      %p240 = scmp.eq.s32.totalorder %s21, 0
      %p241 = por %p239, %p240
      %p242 = scmp.le.s32.totalorder 1, %s15
      %p243 = scmp.lt.s32.totalorder %s15, 9
      %p244 = pnand %p242, %p243
      %p245 = pneg %p244
      // Predicated region
      $region9: #{tpu_custom_call.1} parent=5 // pred_check
        _
      $region10: #{tpu_custom_call.1} parent=5 // pred_check_branch
        %247 = sbr.rel (%p244) target = $region12
      $region11: #{tpu_custom_call.1} parent=5 // pred_region
        %s248 = ssub.s32 %s15, 1
        // Predicated region
        $region13: #{tpu_custom_call.1} parent=11 // pred_check
          %p249 = pneg %p178
        $region14: #{tpu_custom_call.1} parent=11 // pred_check_branch
          %251 = sbr.rel (%p249) target = $region16
        $region15: #{tpu_custom_call.1} parent=11 // pred_region
          _
        $region16: #{tpu_custom_call.1} parent=11 // pred_fallthru
          _
      $region12: #{tpu_custom_call.1} parent=5 // pred_fallthru
        _
      %p252 = scmp.lt.s32.totalorder %s15, 8
      // Predicated region
      $region17: #{tpu_custom_call.1} parent=5 // pred_check
        %p253 = pneg %p252
      $region18: #{tpu_custom_call.1} parent=5 // pred_check_branch
        %255 = sbr.rel (%p253) target = $region20
      $region19: #{tpu_custom_call.1} parent=5 // pred_region
        // Predicated region
        $region21: #{tpu_custom_call.1} parent=19 // pred_check
          %p256 = pneg %p65
        $region22: #{tpu_custom_call.1} parent=19 // pred_check_branch
          %258 = sbr.rel (%p256) target = $region24
        $region23: #{tpu_custom_call.1} parent=19 // pred_region
          %s259 = smul.u32 32, %s23
          %p260 = scmp.lt.s32.totalorder %s22, 1
          %s261 = scalar_select %p260, %s22, 1
          %p262 = scmp.lt.s32.totalorder %s24, 3
          %s263 = scalar_select %p262, %s24, 3
          %p264 = scmp.lt.s32.totalorder %s259, 31
          %s265 = scalar_select %p264, %s259, 31
          %s266 = smul.addr %s263, 32
          %s267 = sadd.s32 %s265, %s266
          %s268 = smul.addr %s261, 128
          %s269 = sadd.s32 %s267, %s268
          %s270 = smul.addr %s269, 4
          %s271 = scalar_lea.vmem %s0, %s270
          %s272 = smul.u32 32, %s23
        $region24: #{tpu_custom_call.1} parent=19 // pred_fallthru
          _
        // Predicated region
        $region25: #{tpu_custom_call.1} parent=19 // pred_check
          %p273 = pneg %p95
        $region26: #{tpu_custom_call.1} parent=19 // pred_check_branch
          %275 = sbr.rel (%p273) target = $region28
        $region27: #{tpu_custom_call.1} parent=19 // pred_region
          %s276 = smul.u32 32, %s25
          %p277 = scmp.lt.s32.totalorder %s22, 1
          %s278 = scalar_select %p277, %s22, 1
          %p279 = scmp.lt.s32.totalorder %s24, 3
          %s280 = scalar_select %p279, %s24, 3
          %p281 = scmp.lt.s32.totalorder %s276, 31
          %s282 = scalar_select %p281, %s276, 31
          %s283 = smul.addr %s280, 32
          %s284 = sadd.s32 %s282, %s283
          %s285 = smul.addr %s278, 128
          %s286 = sadd.s32 %s284, %s285
          %s287 = smul.addr %s286, 4
          %s288 = scalar_lea.vmem %s1, %s287
          %s289 = smul.u32 32, %s25
        $region28: #{tpu_custom_call.1} parent=19 // pred_fallthru
          _
        // Predicated region
        $region29: #{tpu_custom_call.1} parent=19 // pred_check
          %p290 = pneg %p125
        $region30: #{tpu_custom_call.1} parent=19 // pred_check_branch
          %292 = sbr.rel (%p290) target = $region32
        $region31: #{tpu_custom_call.1} parent=19 // pred_region
          %s293 = smul.u32 32, %s25
          %p294 = scmp.lt.s32.totalorder %s22, 1
          %s295 = scalar_select %p294, %s22, 1
          %p296 = scmp.lt.s32.totalorder %s24, 3
          %s297 = scalar_select %p296, %s24, 3
          %p298 = scmp.lt.s32.totalorder %s293, 31
          %s299 = scalar_select %p298, %s293, 31
          %s300 = smul.addr %s297, 32
          %s301 = sadd.s32 %s299, %s300
          %s302 = smul.addr %s295, 128
          %s303 = sadd.s32 %s301, %s302
          %s304 = smul.addr %s303, 4
          %s305 = scalar_lea.vmem %s2, %s304
          %s306 = smul.u32 32, %s25
        $region32: #{tpu_custom_call.1} parent=19 // pred_fallthru
          _
        // Predicated region
        $region33: #{tpu_custom_call.1} parent=19 // pred_check
          %p307 = pneg %p151
        $region34: #{tpu_custom_call.1} parent=19 // pred_check_branch
          %309 = sbr.rel (%p307) target = $region36
        $region35: #{tpu_custom_call.1} parent=19 // pred_region
          %p310 = scmp.lt.s32.totalorder %s24, 3
          %s311 = scalar_select %p310, %s24, 3
          %s312 = smul.addr %s311, 8
          %s313 = scalar_lea.vmem %s3, %s312
        $region36: #{tpu_custom_call.1} parent=19 // pred_fallthru
          _
        // Predicated region
        $region37: #{tpu_custom_call.1} parent=19 // pred_check
          %p314 = pneg %p200
        $region38: #{tpu_custom_call.1} parent=19 // pred_check_branch
          %316 = sbr.rel (%p314) target = $region40
        $region39: #{tpu_custom_call.1} parent=19 // pred_region
          %s317 = smul.u32 2, %s23
          %p318 = scmp.lt.s32.totalorder %s22, 1
          %s319 = scalar_select %p318, %s22, 1
          %p320 = scmp.lt.s32.totalorder %s317, 1
          %s321 = scalar_select %p320, %s317, 1
          %s322 = smul.addr %s319, 2
          %s323 = sadd.s32 %s321, %s322
          %s324 = smul.addr %s323, 8
          %s325 = scalar_lea.vmem %s5, %s324
          %s326 = smul.u32 2, %s23
        $region40: #{tpu_custom_call.1} parent=19 // pred_fallthru
          _
      $region20: #{tpu_custom_call.1} parent=5 // pred_fallthru
        _
      %p327 = scmp.le.s32.totalorder 1, %s15
      %p328 = scmp.lt.s32.totalorder %s15, 9
      %p329 = pnand %p327, %p328
      %p330 = pneg %p329
      // Predicated region
      $region41: #{tpu_custom_call.1} parent=5 // pred_check
        _
      $region42: #{tpu_custom_call.1} parent=5 // pred_check_branch
        %332 = sbr.rel (%p329) target = $region44
      $region43: #{tpu_custom_call.1} parent=5 // pred_region
        %s333 = ssub.s32 %s15, 1
        %s334 = smul.u32 32, %s27
        %p335 = scmp.lt.s32.totalorder %s26, 1
        %s336 = scalar_select %p335, %s26, 1
        %p337 = scmp.lt.s32.totalorder %s28, 3
        %s338 = scalar_select %p337, %s28, 3
        %p339 = scmp.lt.s32.totalorder %s334, 31
        %s340 = scalar_select %p339, %s334, 31
        %s341 = smul.addr %s338, 32
        %s342 = sadd.s32 %s340, %s341
        %s343 = smul.addr %s336, 128
        %s344 = sadd.s32 %s342, %s343
        %s345 = smul.addr %s344, 4
        %s346 = scalar_lea.vmem %s0, %s345
        %p347 = pneg %p71
        %p348 = pneg %p68
        %s349 = smul.u32 32, %s29
        %p350 = scmp.lt.s32.totalorder %s26, 1
        %s351 = scalar_select %p350, %s26, 1
        %p352 = scmp.lt.s32.totalorder %s28, 3
        %s353 = scalar_select %p352, %s28, 3
        %p354 = scmp.lt.s32.totalorder %s349, 31
        %s355 = scalar_select %p354, %s349, 31
        %s356 = smul.addr %s353, 32
        %s357 = sadd.s32 %s355, %s356
        %s358 = smul.addr %s351, 128
        %s359 = sadd.s32 %s357, %s358
        %s360 = smul.addr %s359, 4
        %s361 = scalar_lea.vmem %s1, %s360
        %p362 = pneg %p101
        %p363 = pneg %p98
        %s364 = smul.u32 32, %s29
        %p365 = scmp.lt.s32.totalorder %s26, 1
        %s366 = scalar_select %p365, %s26, 1
        %p367 = scmp.lt.s32.totalorder %s28, 3
        %s368 = scalar_select %p367, %s28, 3
        %p369 = scmp.lt.s32.totalorder %s364, 31
        %s370 = scalar_select %p369, %s364, 31
        %s371 = smul.addr %s368, 32
        %s372 = sadd.s32 %s370, %s371
        %s373 = smul.addr %s366, 128
        %s374 = sadd.s32 %s372, %s373
        %s375 = smul.addr %s374, 4
        %s376 = scalar_lea.vmem %s2, %s375
        %p377 = pneg %p131
        %p378 = pneg %p128
        %p379 = scmp.lt.s32.totalorder %s28, 3
        %s380 = scalar_select %p379, %s28, 3
        %s381 = smul.addr %s380, 8
        %s382 = scalar_lea.vmem %s3, %s381
        %p383 = pneg %p157
        %p384 = pneg %p154
        %p385 = pneg %p178
        %p386 = pneg %p175
        %s387 = smul.u32 2, %s27
        %p388 = scmp.lt.s32.totalorder %s26, 1
        %s389 = scalar_select %p388, %s26, 1
        %p390 = scmp.lt.s32.totalorder %s387, 1
        %s391 = scalar_select %p390, %s387, 1
        %s392 = smul.addr %s389, 2
        %s393 = sadd.s32 %s391, %s392
        %s394 = smul.addr %s393, 8
        %s395 = scalar_lea.vmem %s5, %s394
        %p396 = pneg %p206
        %p397 = pneg %p203
        %p398 = pneg %p234
        %p399 = pneg %p231
        %s400 = sand.u32 %s221, 1
        %s401 = scalar_lea.sflag [#allocation7], %s400
        %s402 = sand.u32 %s221, 1
        %s403 = smul.addr %s402, 16
        %s404 = scalar_lea.vmem [#allocation6], %s403
        %s405 = smul.u32 32, %s27
        %p406 = scmp.lt.s32.totalorder %s26, 1
        %s407 = scalar_select %p406, %s26, 1
        %p408 = scmp.lt.s32.totalorder %s28, 3
        %s409 = scalar_select %p408, %s28, 3
        %p410 = scmp.lt.s32.totalorder %s405, 31
        %s411 = scalar_select %p410, %s405, 31
        %s412 = smul.addr %s409, 32
        %s413 = sadd.s32 %s411, %s412
        %s414 = smul.addr %s407, 128
        %s415 = sadd.s32 %s413, %s414
        %s416 = smul.addr %s415, 4
        %s417 = scalar_lea.vmem %s0, %s416
        %s418 = smul.u32 32, %s27
        %s419 = smul.u32 32, %s29
        %p420 = scmp.lt.s32.totalorder %s26, 1
        %s421 = scalar_select %p420, %s26, 1
        %p422 = scmp.lt.s32.totalorder %s28, 3
        %s423 = scalar_select %p422, %s28, 3
        %p424 = scmp.lt.s32.totalorder %s419, 31
        %s425 = scalar_select %p424, %s419, 31
        %s426 = smul.addr %s423, 32
        %s427 = sadd.s32 %s425, %s426
        %s428 = smul.addr %s421, 128
        %s429 = sadd.s32 %s427, %s428
        %s430 = smul.addr %s429, 4
        %s431 = scalar_lea.vmem %s1, %s430
        %s432 = smul.u32 32, %s29
        %s433 = smul.u32 32, %s29
        %p434 = scmp.lt.s32.totalorder %s26, 1
        %s435 = scalar_select %p434, %s26, 1
        %p436 = scmp.lt.s32.totalorder %s28, 3
        %s437 = scalar_select %p436, %s28, 3
        %p438 = scmp.lt.s32.totalorder %s433, 31
        %s439 = scalar_select %p438, %s433, 31
        %s440 = smul.addr %s437, 32
        %s441 = sadd.s32 %s439, %s440
        %s442 = smul.addr %s435, 128
        %s443 = sadd.s32 %s441, %s442
        %s444 = smul.addr %s443, 4
        %s445 = scalar_lea.vmem %s2, %s444
        %s446 = smul.u32 32, %s29
        %p447 = scmp.lt.s32.totalorder %s28, 3
        %s448 = scalar_select %p447, %s28, 3
        %s449 = smul.addr %s448, 8
        %s450 = scalar_lea.vmem %s3, %s449
        %s451 = smul.u32 2, %s27
        %p452 = scmp.lt.s32.totalorder %s26, 1
        %s453 = scalar_select %p452, %s26, 1
        %p454 = scmp.lt.s32.totalorder %s451, 1
        %s455 = scalar_select %p454, %s451, 1
        %s456 = smul.addr %s453, 2
        %s457 = sadd.s32 %s455, %s456
        %s458 = smul.addr %s457, 8
        %s459 = scalar_lea.vmem %s5, %s458
        %s460 = smul.u32 2, %s27
        %s461 = smul.u32 2, %s27
        %p463 = scmp.eq.s32.totalorder %s28, 0
        %p464 = scmp.eq.s32.totalorder %s29, 0
        %p465 = pnand %p463, %p464
        %p466 = pneg %p465
        // Predicated region
        $region45: #{tpu_custom_call.1} parent=43 // pred_check
          _
        $region46: #{tpu_custom_call.1} parent=43 // pred_check_branch
          %468 = sbr.rel (%p465) target = $region48
        $region47: #{tpu_custom_call.1} parent=43 // pred_region
          %469 = vst [vmem:[#allocation5] sm:$0xff] 0.0
          %470 = vst [vmem:[#allocation5 + $0x8] sm:$0xff] 0.0
        $region48: #{tpu_custom_call.1} parent=43 // pred_fallthru
          _
        // Predicated region
        $region49: #{tpu_custom_call.1} parent=43 // pred_check
          %p471 = pneg %p464
        $region50: #{tpu_custom_call.1} parent=43 // pred_check_branch
          %473 = sbr.rel (%p471) target = $region52
        $region51: #{tpu_custom_call.1} parent=43 // pred_region
          %vm474 = vcmask 7168
          %475 = vst.msk [vmem:[#allocation2] sm:$0xff] %vm474, -inf
          %476 = vst.msk [vmem:[#allocation2 + $0x8] sm:$0xff] %vm474, -inf
          %477 = vst.msk [vmem:[#allocation2 + $0x10] sm:$0xff] %vm474, -inf
          %478 = vst.msk [vmem:[#allocation2 + $0x18] sm:$0xff] %vm474, -inf
          %479 = vst.msk [vmem:[#allocation2 + $0x20] sm:$0xff] %vm474, -inf
          %480 = vst.msk [vmem:[#allocation2 + $0x28] sm:$0xff] %vm474, -inf
          %481 = vst.msk [vmem:[#allocation2 + $0x30] sm:$0xff] %vm474, -inf
          %482 = vst.msk [vmem:[#allocation2 + $0x38] sm:$0xff] %vm474, -inf
          %483 = vst.msk [vmem:[#allocation2 + $0x40] sm:$0xff] %vm474, -inf
          %484 = vst.msk [vmem:[#allocation2 + $0x48] sm:$0xff] %vm474, -inf
          %485 = vst.msk [vmem:[#allocation2 + $0x50] sm:$0xff] %vm474, -inf
          %486 = vst.msk [vmem:[#allocation2 + $0x58] sm:$0xff] %vm474, -inf
          %487 = vst.msk [vmem:[#allocation2 + $0x60] sm:$0xff] %vm474, -inf
          %488 = vst.msk [vmem:[#allocation2 + $0x68] sm:$0xff] %vm474, -inf
          %489 = vst.msk [vmem:[#allocation2 + $0x70] sm:$0xff] %vm474, -inf
          %490 = vst.msk [vmem:[#allocation2 + $0x78] sm:$0xff] %vm474, -inf
          %491 = vst.msk [vmem:[#allocation2 + $0x80] sm:$0xff] %vm474, -inf
          %492 = vst.msk [vmem:[#allocation2 + $0x88] sm:$0xff] %vm474, -inf
          %493 = vst.msk [vmem:[#allocation2 + $0x90] sm:$0xff] %vm474, -inf
          %494 = vst.msk [vmem:[#allocation2 + $0x98] sm:$0xff] %vm474, -inf
          %495 = vst.msk [vmem:[#allocation2 + $0xa0] sm:$0xff] %vm474, -inf
          %496 = vst.msk [vmem:[#allocation2 + $0xa8] sm:$0xff] %vm474, -inf
          %497 = vst.msk [vmem:[#allocation2 + $0xb0] sm:$0xff] %vm474, -inf
          %498 = vst.msk [vmem:[#allocation2 + $0xb8] sm:$0xff] %vm474, -inf
          %499 = vst.msk [vmem:[#allocation2 + $0xc0] sm:$0xff] %vm474, -inf
          %500 = vst.msk [vmem:[#allocation2 + $0xc8] sm:$0xff] %vm474, -inf
          %501 = vst.msk [vmem:[#allocation2 + $0xd0] sm:$0xff] %vm474, -inf
          %502 = vst.msk [vmem:[#allocation2 + $0xd8] sm:$0xff] %vm474, -inf
          %503 = vst.msk [vmem:[#allocation2 + $0xe0] sm:$0xff] %vm474, -inf
          %504 = vst.msk [vmem:[#allocation2 + $0xe8] sm:$0xff] %vm474, -inf
          %505 = vst.msk [vmem:[#allocation2 + $0xf0] sm:$0xff] %vm474, -inf
          %506 = vst.msk [vmem:[#allocation2 + $0xf8] sm:$0xff] %vm474, -inf
          %507 = vst.msk [vmem:[#allocation3] sm:$0xff] %vm474, 0.0
          %508 = vst.msk [vmem:[#allocation3 + $0x8] sm:$0xff] %vm474, 0.0
          %509 = vst.msk [vmem:[#allocation3 + $0x10] sm:$0xff] %vm474, 0.0
          %510 = vst.msk [vmem:[#allocation3 + $0x18] sm:$0xff] %vm474, 0.0
          %511 = vst.msk [vmem:[#allocation3 + $0x20] sm:$0xff] %vm474, 0.0
          %512 = vst.msk [vmem:[#allocation3 + $0x28] sm:$0xff] %vm474, 0.0
          %513 = vst.msk [vmem:[#allocation3 + $0x30] sm:$0xff] %vm474, 0.0
          %514 = vst.msk [vmem:[#allocation3 + $0x38] sm:$0xff] %vm474, 0.0
          %515 = vst.msk [vmem:[#allocation3 + $0x40] sm:$0xff] %vm474, 0.0
          %516 = vst.msk [vmem:[#allocation3 + $0x48] sm:$0xff] %vm474, 0.0
          %517 = vst.msk [vmem:[#allocation3 + $0x50] sm:$0xff] %vm474, 0.0
          %518 = vst.msk [vmem:[#allocation3 + $0x58] sm:$0xff] %vm474, 0.0
          %519 = vst.msk [vmem:[#allocation3 + $0x60] sm:$0xff] %vm474, 0.0
          %520 = vst.msk [vmem:[#allocation3 + $0x68] sm:$0xff] %vm474, 0.0
          %521 = vst.msk [vmem:[#allocation3 + $0x70] sm:$0xff] %vm474, 0.0
          %522 = vst.msk [vmem:[#allocation3 + $0x78] sm:$0xff] %vm474, 0.0
          %523 = vst.msk [vmem:[#allocation3 + $0x80] sm:$0xff] %vm474, 0.0
          %524 = vst.msk [vmem:[#allocation3 + $0x88] sm:$0xff] %vm474, 0.0
          %525 = vst.msk [vmem:[#allocation3 + $0x90] sm:$0xff] %vm474, 0.0
          %526 = vst.msk [vmem:[#allocation3 + $0x98] sm:$0xff] %vm474, 0.0
          %527 = vst.msk [vmem:[#allocation3 + $0xa0] sm:$0xff] %vm474, 0.0
          %528 = vst.msk [vmem:[#allocation3 + $0xa8] sm:$0xff] %vm474, 0.0
          %529 = vst.msk [vmem:[#allocation3 + $0xb0] sm:$0xff] %vm474, 0.0
          %530 = vst.msk [vmem:[#allocation3 + $0xb8] sm:$0xff] %vm474, 0.0
          %531 = vst.msk [vmem:[#allocation3 + $0xc0] sm:$0xff] %vm474, 0.0
          %532 = vst.msk [vmem:[#allocation3 + $0xc8] sm:$0xff] %vm474, 0.0
          %533 = vst.msk [vmem:[#allocation3 + $0xd0] sm:$0xff] %vm474, 0.0
          %534 = vst.msk [vmem:[#allocation3 + $0xd8] sm:$0xff] %vm474, 0.0
          %535 = vst.msk [vmem:[#allocation3 + $0xe0] sm:$0xff] %vm474, 0.0
          %536 = vst.msk [vmem:[#allocation3 + $0xe8] sm:$0xff] %vm474, 0.0
          %537 = vst.msk [vmem:[#allocation3 + $0xf0] sm:$0xff] %vm474, 0.0
          %538 = vst.msk [vmem:[#allocation3 + $0xf8] sm:$0xff] %vm474, 0.0
          %vm539 = vcmask 261120
          %540 = vst.msk [vmem:[#allocation4] sm:$0xff] %vm539, 0.0
          %541 = vst.msk [vmem:[#allocation4 + $0x8] sm:$0xff] %vm539, 0.0
          %542 = vst.msk [vmem:[#allocation4 + $0x10] sm:$0xff] %vm539, 0.0
          %543 = vst.msk [vmem:[#allocation4 + $0x18] sm:$0xff] %vm539, 0.0
          %544 = vst.msk [vmem:[#allocation4 + $0x20] sm:$0xff] %vm539, 0.0
          %545 = vst.msk [vmem:[#allocation4 + $0x28] sm:$0xff] %vm539, 0.0
          %546 = vst.msk [vmem:[#allocation4 + $0x30] sm:$0xff] %vm539, 0.0
          %547 = vst.msk [vmem:[#allocation4 + $0x38] sm:$0xff] %vm539, 0.0
          %548 = vst.msk [vmem:[#allocation4 + $0x40] sm:$0xff] %vm539, 0.0
          %549 = vst.msk [vmem:[#allocation4 + $0x48] sm:$0xff] %vm539, 0.0
          %550 = vst.msk [vmem:[#allocation4 + $0x50] sm:$0xff] %vm539, 0.0
          %551 = vst.msk [vmem:[#allocation4 + $0x58] sm:$0xff] %vm539, 0.0
          %552 = vst.msk [vmem:[#allocation4 + $0x60] sm:$0xff] %vm539, 0.0
          %553 = vst.msk [vmem:[#allocation4 + $0x68] sm:$0xff] %vm539, 0.0
          %554 = vst.msk [vmem:[#allocation4 + $0x70] sm:$0xff] %vm539, 0.0
          %555 = vst.msk [vmem:[#allocation4 + $0x78] sm:$0xff] %vm539, 0.0
          %556 = vst.msk [vmem:[#allocation4 + $0x80] sm:$0xff] %vm539, 0.0
          %557 = vst.msk [vmem:[#allocation4 + $0x88] sm:$0xff] %vm539, 0.0
          %558 = vst.msk [vmem:[#allocation4 + $0x90] sm:$0xff] %vm539, 0.0
          %559 = vst.msk [vmem:[#allocation4 + $0x98] sm:$0xff] %vm539, 0.0
          %560 = vst.msk [vmem:[#allocation4 + $0xa0] sm:$0xff] %vm539, 0.0
          %561 = vst.msk [vmem:[#allocation4 + $0xa8] sm:$0xff] %vm539, 0.0
          %562 = vst.msk [vmem:[#allocation4 + $0xb0] sm:$0xff] %vm539, 0.0
          %563 = vst.msk [vmem:[#allocation4 + $0xb8] sm:$0xff] %vm539, 0.0
          %564 = vst.msk [vmem:[#allocation4 + $0xc0] sm:$0xff] %vm539, 0.0
          %565 = vst.msk [vmem:[#allocation4 + $0xc8] sm:$0xff] %vm539, 0.0
          %566 = vst.msk [vmem:[#allocation4 + $0xd0] sm:$0xff] %vm539, 0.0
          %567 = vst.msk [vmem:[#allocation4 + $0xd8] sm:$0xff] %vm539, 0.0
          %568 = vst.msk [vmem:[#allocation4 + $0xe0] sm:$0xff] %vm539, 0.0
          %569 = vst.msk [vmem:[#allocation4 + $0xe8] sm:$0xff] %vm539, 0.0
          %570 = vst.msk [vmem:[#allocation4 + $0xf0] sm:$0xff] %vm539, 0.0
          %571 = vst.msk [vmem:[#allocation4 + $0xf8] sm:$0xff] %vm539, 0.0
        $region52: #{tpu_custom_call.1} parent=43 // pred_fallthru
          _
        %v572 = vld [vmem:[%s417] sm:$0xf]
        %v573 = vld [vmem:[%s417 + $0x4] sm:$0xf]
        %v574 = vld [vmem:[%s417 + $0x8] sm:$0xf]
        %v575 = vld [vmem:[%s417 + $0xc] sm:$0xf]
        %v576 = vld [vmem:[%s417 + $0x10] sm:$0xf]
        %v577 = vld [vmem:[%s417 + $0x14] sm:$0xf]
        %v578 = vld [vmem:[%s417 + $0x18] sm:$0xf]
        %v579 = vld [vmem:[%s417 + $0x1c] sm:$0xf]
        %v580 = vld [vmem:[%s417 + $0x20] sm:$0xf]
        %v581 = vld [vmem:[%s417 + $0x24] sm:$0xf]
        %v582 = vld [vmem:[%s417 + $0x28] sm:$0xf]
        %v583 = vld [vmem:[%s417 + $0x2c] sm:$0xf]
        %v584 = vld [vmem:[%s417 + $0x30] sm:$0xf]
        %v585 = vld [vmem:[%s417 + $0x34] sm:$0xf]
        %v586 = vld [vmem:[%s417 + $0x38] sm:$0xf]
        %v587 = vld [vmem:[%s417 + $0x3c] sm:$0xf]
        %v588 = vld [vmem:[%s417 + $0x40] sm:$0xf]
        %v589 = vld [vmem:[%s417 + $0x44] sm:$0xf]
        %v590 = vld [vmem:[%s417 + $0x48] sm:$0xf]
        %v591 = vld [vmem:[%s417 + $0x4c] sm:$0xf]
        %v592 = vld [vmem:[%s417 + $0x50] sm:$0xf]
        %v593 = vld [vmem:[%s417 + $0x54] sm:$0xf]
        %v594 = vld [vmem:[%s417 + $0x58] sm:$0xf]
        %v595 = vld [vmem:[%s417 + $0x5c] sm:$0xf]
        %v596 = vld [vmem:[%s417 + $0x60] sm:$0xf]
        %v597 = vld [vmem:[%s417 + $0x64] sm:$0xf]
        %v598 = vld [vmem:[%s417 + $0x68] sm:$0xf]
        %v599 = vld [vmem:[%s417 + $0x6c] sm:$0xf]
        %v600 = vld [vmem:[%s417 + $0x70] sm:$0xf]
        %v601 = vld [vmem:[%s417 + $0x74] sm:$0xf]
        %v602 = vld [vmem:[%s417 + $0x78] sm:$0xf]
        %v603 = vld [vmem:[%s417 + $0x7c] sm:$0xf]
        %v604 = vld [vmem:[%s431] sm:$0xf]
        %v605 = vld [vmem:[%s431 + $0x4] sm:$0xf]
        %v606 = vld [vmem:[%s431 + $0x8] sm:$0xf]
        %v607 = vld [vmem:[%s431 + $0xc] sm:$0xf]
        %v608 = vld [vmem:[%s431 + $0x10] sm:$0xf]
        %v609 = vld [vmem:[%s431 + $0x14] sm:$0xf]
        %v610 = vld [vmem:[%s431 + $0x18] sm:$0xf]
        %v611 = vld [vmem:[%s431 + $0x1c] sm:$0xf]
        %v612 = vld [vmem:[%s431 + $0x20] sm:$0xf]
        %v613 = vld [vmem:[%s431 + $0x24] sm:$0xf]
        %v614 = vld [vmem:[%s431 + $0x28] sm:$0xf]
        %v615 = vld [vmem:[%s431 + $0x2c] sm:$0xf]
        %v616 = vld [vmem:[%s431 + $0x30] sm:$0xf]
        %v617 = vld [vmem:[%s431 + $0x34] sm:$0xf]
        %v618 = vld [vmem:[%s431 + $0x38] sm:$0xf]
        %v619 = vld [vmem:[%s431 + $0x3c] sm:$0xf]
        %v620 = vld [vmem:[%s431 + $0x40] sm:$0xf]
        %v621 = vld [vmem:[%s431 + $0x44] sm:$0xf]
        %v622 = vld [vmem:[%s431 + $0x48] sm:$0xf]
        %v623 = vld [vmem:[%s431 + $0x4c] sm:$0xf]
        %v624 = vld [vmem:[%s431 + $0x50] sm:$0xf]
        %v625 = vld [vmem:[%s431 + $0x54] sm:$0xf]
        %v626 = vld [vmem:[%s431 + $0x58] sm:$0xf]
        %v627 = vld [vmem:[%s431 + $0x5c] sm:$0xf]
        %v628 = vld [vmem:[%s431 + $0x60] sm:$0xf]
        %v629 = vld [vmem:[%s431 + $0x64] sm:$0xf]
        %v630 = vld [vmem:[%s431 + $0x68] sm:$0xf]
        %v631 = vld [vmem:[%s431 + $0x6c] sm:$0xf]
        %v632 = vld [vmem:[%s431 + $0x70] sm:$0xf]
        %v633 = vld [vmem:[%s431 + $0x74] sm:$0xf]
        %v634 = vld [vmem:[%s431 + $0x78] sm:$0xf]
        %v635 = vld [vmem:[%s431 + $0x7c] sm:$0xf]
        %v636 = vld [vmem:[%s445] sm:$0xf]
        %v637 = vld [vmem:[%s445 + $0x4] sm:$0xf]
        %v638 = vld [vmem:[%s445 + $0x8] sm:$0xf]
        %v639 = vld [vmem:[%s445 + $0xc] sm:$0xf]
        %v640 = vld [vmem:[%s445 + $0x10] sm:$0xf]
        %v641 = vld [vmem:[%s445 + $0x14] sm:$0xf]
        %v642 = vld [vmem:[%s445 + $0x18] sm:$0xf]
        %v643 = vld [vmem:[%s445 + $0x1c] sm:$0xf]
        %v644 = vld [vmem:[%s445 + $0x20] sm:$0xf]
        %v645 = vld [vmem:[%s445 + $0x24] sm:$0xf]
        %v646 = vld [vmem:[%s445 + $0x28] sm:$0xf]
        %v647 = vld [vmem:[%s445 + $0x2c] sm:$0xf]
        %v648 = vld [vmem:[%s445 + $0x30] sm:$0xf]
        %v649 = vld [vmem:[%s445 + $0x34] sm:$0xf]
        %v650 = vld [vmem:[%s445 + $0x38] sm:$0xf]
        %v651 = vld [vmem:[%s445 + $0x3c] sm:$0xf]
        %v652 = vld [vmem:[%s445 + $0x40] sm:$0xf]
        %v653 = vld [vmem:[%s445 + $0x44] sm:$0xf]
        %v654 = vld [vmem:[%s445 + $0x48] sm:$0xf]
        %v655 = vld [vmem:[%s445 + $0x4c] sm:$0xf]
        %v656 = vld [vmem:[%s445 + $0x50] sm:$0xf]
        %v657 = vld [vmem:[%s445 + $0x54] sm:$0xf]
        %v658 = vld [vmem:[%s445 + $0x58] sm:$0xf]
        %v659 = vld [vmem:[%s445 + $0x5c] sm:$0xf]
        %v660 = vld [vmem:[%s445 + $0x60] sm:$0xf]
        %v661 = vld [vmem:[%s445 + $0x64] sm:$0xf]
        %v662 = vld [vmem:[%s445 + $0x68] sm:$0xf]
        %v663 = vld [vmem:[%s445 + $0x6c] sm:$0xf]
        %v664 = vld [vmem:[%s445 + $0x70] sm:$0xf]
        %v665 = vld [vmem:[%s445 + $0x74] sm:$0xf]
        %v666 = vld [vmem:[%s445 + $0x78] sm:$0xf]
        %v667 = vld [vmem:[%s445 + $0x7c] sm:$0xf]
        %v700 = vunpack.c.l.b16 %v572
        %v701 = vunpack.c.l.b16 %v573
        %v702 = vunpack.c.l.b16 %v574
        %v703 = vunpack.c.l.b16 %v575
        %v704 = vunpack.c.l.b16 %v576
        %v705 = vunpack.c.l.b16 %v577
        %v706 = vunpack.c.l.b16 %v578
        %v707 = vunpack.c.l.b16 %v579
        %v708 = vunpack.c.l.b16 %v580
        %v709 = vunpack.c.l.b16 %v581
        %v710 = vunpack.c.l.b16 %v582
        %v711 = vunpack.c.l.b16 %v583
        %v712 = vunpack.c.l.b16 %v584
        %v713 = vunpack.c.l.b16 %v585
        %v714 = vunpack.c.l.b16 %v586
        %v715 = vunpack.c.l.b16 %v587
        %v716 = vunpack.c.l.b16 %v588
        %v717 = vunpack.c.l.b16 %v589
        %v718 = vunpack.c.l.b16 %v590
        %v719 = vunpack.c.l.b16 %v591
        %v720 = vunpack.c.l.b16 %v592
        %v721 = vunpack.c.l.b16 %v593
        %v722 = vunpack.c.l.b16 %v594
        %v723 = vunpack.c.l.b16 %v595
        %v724 = vunpack.c.l.b16 %v596
        %v725 = vunpack.c.l.b16 %v597
        %v726 = vunpack.c.l.b16 %v598
        %v727 = vunpack.c.l.b16 %v599
        %v728 = vunpack.c.l.b16 %v600
        %v729 = vunpack.c.l.b16 %v601
        %v730 = vunpack.c.l.b16 %v602
        %v731 = vunpack.c.l.b16 %v603
        %v732 = vpack.c.b16 %v701, %v700
        %v733 = vpack.c.b16 %v703, %v702
        %v734 = vpack.c.b16 %v705, %v704
        %v735 = vpack.c.b16 %v707, %v706
        %v736 = vpack.c.b16 %v709, %v708
        %v737 = vpack.c.b16 %v711, %v710
        %v738 = vpack.c.b16 %v713, %v712
        %v739 = vpack.c.b16 %v715, %v714
        %v740 = vpack.c.b16 %v717, %v716
        %v741 = vpack.c.b16 %v719, %v718
        %v742 = vpack.c.b16 %v721, %v720
        %v743 = vpack.c.b16 %v723, %v722
        %v744 = vpack.c.b16 %v725, %v724
        %v745 = vpack.c.b16 %v727, %v726
        %v746 = vpack.c.b16 %v729, %v728
        %v747 = vpack.c.b16 %v731, %v730
        %v780 = vunpack.c.l.b16 %v604
        %v781 = vunpack.c.l.b16 %v605
        %v782 = vunpack.c.l.b16 %v606
        %v783 = vunpack.c.l.b16 %v607
        %v784 = vunpack.c.l.b16 %v608
        %v785 = vunpack.c.l.b16 %v609
        %v786 = vunpack.c.l.b16 %v610
        %v787 = vunpack.c.l.b16 %v611
        %v788 = vunpack.c.l.b16 %v612
        %v789 = vunpack.c.l.b16 %v613
        %v790 = vunpack.c.l.b16 %v614
        %v791 = vunpack.c.l.b16 %v615
        %v792 = vunpack.c.l.b16 %v616
        %v793 = vunpack.c.l.b16 %v617
        %v794 = vunpack.c.l.b16 %v618
        %v795 = vunpack.c.l.b16 %v619
        %v796 = vunpack.c.l.b16 %v620
        %v797 = vunpack.c.l.b16 %v621
        %v798 = vunpack.c.l.b16 %v622
        %v799 = vunpack.c.l.b16 %v623
        %v800 = vunpack.c.l.b16 %v624
        %v801 = vunpack.c.l.b16 %v625
        %v802 = vunpack.c.l.b16 %v626
        %v803 = vunpack.c.l.b16 %v627
        %v804 = vunpack.c.l.b16 %v628
        %v805 = vunpack.c.l.b16 %v629
        %v806 = vunpack.c.l.b16 %v630
        %v807 = vunpack.c.l.b16 %v631
        %v808 = vunpack.c.l.b16 %v632
        %v809 = vunpack.c.l.b16 %v633
        %v810 = vunpack.c.l.b16 %v634
        %v811 = vunpack.c.l.b16 %v635
        %v812 = vpack.c.b16 %v781, %v780
        %v813 = vpack.c.b16 %v783, %v782
        %v814 = vpack.c.b16 %v785, %v784
        %v815 = vpack.c.b16 %v787, %v786
        %v816 = vpack.c.b16 %v789, %v788
        %v817 = vpack.c.b16 %v791, %v790
        %v818 = vpack.c.b16 %v793, %v792
        %v819 = vpack.c.b16 %v795, %v794
        %v820 = vpack.c.b16 %v797, %v796
        %v821 = vpack.c.b16 %v799, %v798
        %v822 = vpack.c.b16 %v801, %v800
        %v823 = vpack.c.b16 %v803, %v802
        %v824 = vpack.c.b16 %v805, %v804
        %v825 = vpack.c.b16 %v807, %v806
        %v826 = vpack.c.b16 %v809, %v808
        %v827 = vpack.c.b16 %v811, %v810
        %vm828 = vcmask 261120
        %v830 = vsel %vm828, %v732, 0
        %v833 = vsel %vm828, %v733, 0
        %v836 = vsel %vm828, %v734, 0
        %v839 = vsel %vm828, %v735, 0
        %v842 = vsel %vm828, %v736, 0
        %v845 = vsel %vm828, %v737, 0
        %v848 = vsel %vm828, %v738, 0
        %v851 = vsel %vm828, %v739, 0
        %v854 = vsel %vm828, %v740, 0
        %v857 = vsel %vm828, %v741, 0
        %v860 = vsel %vm828, %v742, 0
        %v863 = vsel %vm828, %v743, 0
        %v866 = vsel %vm828, %v744, 0
        %v869 = vsel %vm828, %v745, 0
        %v872 = vsel %vm828, %v746, 0
        %v875 = vsel %vm828, %v747, 0
        %v878 = vsel %vm828, %v812, 0
        %v881 = vsel %vm828, %v813, 0
        %v884 = vsel %vm828, %v814, 0
        %v887 = vsel %vm828, %v815, 0
        %v890 = vsel %vm828, %v816, 0
        %v893 = vsel %vm828, %v817, 0
        %v896 = vsel %vm828, %v818, 0
        %v899 = vsel %vm828, %v819, 0
        %v902 = vsel %vm828, %v820, 0
        %v905 = vsel %vm828, %v821, 0
        %v908 = vsel %vm828, %v822, 0
        %v911 = vsel %vm828, %v823, 0
        %v914 = vsel %vm828, %v824, 0
        %v917 = vsel %vm828, %v825, 0
        %v920 = vsel %vm828, %v826, 0
        %v923 = vsel %vm828, %v827, 0
        %925 = vmatprep.subr.bf16.mxu0 0
        %926 = vmatpush1.bf16.xpose.msra.mxu0 %v878
        %927 = vmatprep.subr.bf16.mxu0 0
        %928 = vmatpush1.bf16.xpose.msra.mxu0 %v881
        %929 = vmatprep.subr.bf16.mxu0 0
        %930 = vmatpush1.bf16.xpose.msra.mxu0 %v884
        %931 = vmatprep.subr.bf16.mxu0 0
        %932 = vmatpush1.bf16.xpose.msra.mxu0 %v887
        %933 = vmatprep.subr.bf16.mxu0 0
        %934 = vmatpush1.bf16.xpose.msra.mxu0 %v890
        %935 = vmatprep.subr.bf16.mxu0 0
        %936 = vmatpush1.bf16.xpose.msra.mxu0 %v893
        %937 = vmatprep.subr.bf16.mxu0 0
        %938 = vmatpush1.bf16.xpose.msra.mxu0 %v896
        %939 = vmatprep.subr.bf16.mxu0 0
        %940 = vmatpush1.bf16.xpose.msra.mxu0 %v899
        %941 = vmatprep.subr.bf16.mxu0 0
        %942 = vmatpush1.bf16.xpose.msra.mxu0 %v902
        %943 = vmatprep.subr.bf16.mxu0 0
        %944 = vmatpush1.bf16.xpose.msra.mxu0 %v905
        %945 = vmatprep.subr.bf16.mxu0 0
        %946 = vmatpush1.bf16.xpose.msra.mxu0 %v908
        %947 = vmatprep.subr.bf16.mxu0 0
        %948 = vmatpush1.bf16.xpose.msra.mxu0 %v911
        %949 = vmatprep.subr.bf16.mxu0 0
        %950 = vmatpush1.bf16.xpose.msra.mxu0 %v914
        %951 = vmatprep.subr.bf16.mxu0 0
        %952 = vmatpush1.bf16.xpose.msra.mxu0 %v917
        %953 = vmatprep.subr.bf16.mxu0 0
        %954 = vmatpush1.bf16.xpose.msra.mxu0 %v920
        %955 = vmatprep.subr.bf16.mxu0 0
        %956 = vmatpush1.bf16.xpose.msra.mxu0 %v923
        %957 = vmatprep.mubr.bf16.mxu0 0
        %958 = vmatmul.mubr.bf16.gmra.mrb[0].mxu0 %v830
        %v959 = vpop.f32.mrb[0].mxu0
        %v960 = vadd.f32 0.0, %v959
        %v961 = vpop.f32.mrb[0].mxu0
        %v962 = vadd.f32 0.0, %v961
        %v963 = vpop.f32.mrb[0].mxu0
        %v964 = vadd.f32 0.0, %v963
        %v965 = vpop.f32.mrb[0].mxu0
        %v966 = vadd.f32 0.0, %v965
        %967 = vmatprep.mubr.bf16.mxu0 0
        %968 = vmatmul.mubr.bf16.gmra.mrb[0].mxu0 %v833
        %v969 = vpop.f32.mrb[0].mxu0
        %v970 = vadd.f32 0.0, %v969
        %v971 = vpop.f32.mrb[0].mxu0
        %v972 = vadd.f32 0.0, %v971
        %v973 = vpop.f32.mrb[0].mxu0
        %v974 = vadd.f32 0.0, %v973
        %v975 = vpop.f32.mrb[0].mxu0
        %v976 = vadd.f32 0.0, %v975
        %977 = vmatprep.mubr.bf16.mxu0 0
        %978 = vmatmul.mubr.bf16.gmra.mrb[0].mxu0 %v836
        %v979 = vpop.f32.mrb[0].mxu0
        %v980 = vadd.f32 0.0, %v979
        %v981 = vpop.f32.mrb[0].mxu0
        %v982 = vadd.f32 0.0, %v981
        %v983 = vpop.f32.mrb[0].mxu0
        %v984 = vadd.f32 0.0, %v983
        %v985 = vpop.f32.mrb[0].mxu0
        %v986 = vadd.f32 0.0, %v985
        %987 = vmatprep.mubr.bf16.mxu0 0
        %988 = vmatmul.mubr.bf16.gmra.mrb[0].mxu0 %v839
        %v989 = vpop.f32.mrb[0].mxu0
        %v990 = vadd.f32 0.0, %v989
        %v991 = vpop.f32.mrb[0].mxu0
        %v992 = vadd.f32 0.0, %v991
        %v993 = vpop.f32.mrb[0].mxu0
        %v994 = vadd.f32 0.0, %v993
        %v995 = vpop.f32.mrb[0].mxu0
        %v996 = vadd.f32 0.0, %v995
        %997 = vmatprep.mubr.bf16.mxu0 0
        %998 = vmatmul.mubr.bf16.gmra.mrb[0].mxu0 %v842
        %v999 = vpop.f32.mrb[0].mxu0
        %v1000 = vadd.f32 0.0, %v999
        %v1001 = vpop.f32.mrb[0].mxu0
        %v1002 = vadd.f32 0.0, %v1001
        %v1003 = vpop.f32.mrb[0].mxu0
        %v1004 = vadd.f32 0.0, %v1003
        %v1005 = vpop.f32.mrb[0].mxu0
        %v1006 = vadd.f32 0.0, %v1005
        %1007 = vmatprep.mubr.bf16.mxu0 0
        %1008 = vmatmul.mubr.bf16.gmra.mrb[0].mxu0 %v845
        %v1009 = vpop.f32.mrb[0].mxu0
        %v1010 = vadd.f32 0.0, %v1009
        %v1011 = vpop.f32.mrb[0].mxu0
        %v1012 = vadd.f32 0.0, %v1011
        %v1013 = vpop.f32.mrb[0].mxu0
        %v1014 = vadd.f32 0.0, %v1013
        %v1015 = vpop.f32.mrb[0].mxu0
        %v1016 = vadd.f32 0.0, %v1015
        %1017 = vmatprep.mubr.bf16.mxu0 0
        %1018 = vmatmul.mubr.bf16.gmra.mrb[0].mxu0 %v848
        %v1019 = vpop.f32.mrb[0].mxu0
        %v1020 = vadd.f32 0.0, %v1019
        %v1021 = vpop.f32.mrb[0].mxu0
        %v1022 = vadd.f32 0.0, %v1021
        %v1023 = vpop.f32.mrb[0].mxu0
        %v1024 = vadd.f32 0.0, %v1023
        %v1025 = vpop.f32.mrb[0].mxu0
        %v1026 = vadd.f32 0.0, %v1025
        %1027 = vmatprep.mubr.bf16.mxu0 0
        %1028 = vmatmul.mubr.bf16.gmra.mrb[0].mxu0 %v851
        %v1029 = vpop.f32.mrb[0].mxu0
        %v1030 = vadd.f32 0.0, %v1029
        %v1031 = vpop.f32.mrb[0].mxu0
        %v1032 = vadd.f32 0.0, %v1031
        %v1033 = vpop.f32.mrb[0].mxu0
        %v1034 = vadd.f32 0.0, %v1033
        %v1035 = vpop.f32.mrb[0].mxu0
        %v1036 = vadd.f32 0.0, %v1035
        %1037 = vmatprep.mubr.bf16.mxu0 0
        %1038 = vmatmul.mubr.bf16.gmra.mrb[0].mxu0 %v854
        %v1039 = vpop.f32.mrb[0].mxu0
        %v1040 = vadd.f32 0.0, %v1039
        %v1041 = vpop.f32.mrb[0].mxu0
        %v1042 = vadd.f32 0.0, %v1041
        %v1043 = vpop.f32.mrb[0].mxu0
        %v1044 = vadd.f32 0.0, %v1043
        %v1045 = vpop.f32.mrb[0].mxu0
        %v1046 = vadd.f32 0.0, %v1045
        %1047 = vmatprep.mubr.bf16.mxu0 0
        %1048 = vmatmul.mubr.bf16.gmra.mrb[0].mxu0 %v857
        %v1049 = vpop.f32.mrb[0].mxu0
        %v1050 = vadd.f32 0.0, %v1049
        %v1051 = vpop.f32.mrb[0].mxu0
        %v1052 = vadd.f32 0.0, %v1051
        %v1053 = vpop.f32.mrb[0].mxu0
        %v1054 = vadd.f32 0.0, %v1053
        %v1055 = vpop.f32.mrb[0].mxu0
        %v1056 = vadd.f32 0.0, %v1055
        %1057 = vmatprep.mubr.bf16.mxu0 0
        %1058 = vmatmul.mubr.bf16.gmra.mrb[0].mxu0 %v860
        %v1059 = vpop.f32.mrb[0].mxu0
        %v1060 = vadd.f32 0.0, %v1059
        %v1061 = vpop.f32.mrb[0].mxu0
        %v1062 = vadd.f32 0.0, %v1061
        %v1063 = vpop.f32.mrb[0].mxu0
        %v1064 = vadd.f32 0.0, %v1063
        %v1065 = vpop.f32.mrb[0].mxu0
        %v1066 = vadd.f32 0.0, %v1065
        %1067 = vmatprep.mubr.bf16.mxu0 0
        %1068 = vmatmul.mubr.bf16.gmra.mrb[0].mxu0 %v863
        %v1069 = vpop.f32.mrb[0].mxu0
        %v1070 = vadd.f32 0.0, %v1069
        %v1071 = vpop.f32.mrb[0].mxu0
        %v1072 = vadd.f32 0.0, %v1071
        %v1073 = vpop.f32.mrb[0].mxu0
        %v1074 = vadd.f32 0.0, %v1073
        %v1075 = vpop.f32.mrb[0].mxu0
        %v1076 = vadd.f32 0.0, %v1075
        %1077 = vmatprep.mubr.bf16.mxu0 0
        %1078 = vmatmul.mubr.bf16.gmra.mrb[0].mxu0 %v866
        %v1079 = vpop.f32.mrb[0].mxu0
        %v1080 = vadd.f32 0.0, %v1079
        %v1081 = vpop.f32.mrb[0].mxu0
        %v1082 = vadd.f32 0.0, %v1081
        %v1083 = vpop.f32.mrb[0].mxu0
        %v1084 = vadd.f32 0.0, %v1083
        %v1085 = vpop.f32.mrb[0].mxu0
        %v1086 = vadd.f32 0.0, %v1085
        %1087 = vmatprep.mubr.bf16.mxu0 0
        %1088 = vmatmul.mubr.bf16.gmra.mrb[0].mxu0 %v869
        %v1089 = vpop.f32.mrb[0].mxu0
        %v1090 = vadd.f32 0.0, %v1089
        %v1091 = vpop.f32.mrb[0].mxu0
        %v1092 = vadd.f32 0.0, %v1091
        %v1093 = vpop.f32.mrb[0].mxu0
        %v1094 = vadd.f32 0.0, %v1093
        %v1095 = vpop.f32.mrb[0].mxu0
        %v1096 = vadd.f32 0.0, %v1095
        %1097 = vmatprep.mubr.bf16.mxu0 0
        %1098 = vmatmul.mubr.bf16.gmra.mrb[0].mxu0 %v872
        %v1099 = vpop.f32.mrb[0].mxu0
        %v1100 = vadd.f32 0.0, %v1099
        %v1101 = vpop.f32.mrb[0].mxu0
        %v1102 = vadd.f32 0.0, %v1101
        %v1103 = vpop.f32.mrb[0].mxu0
        %v1104 = vadd.f32 0.0, %v1103
        %v1105 = vpop.f32.mrb[0].mxu0
        %v1106 = vadd.f32 0.0, %v1105
        %1107 = vmatprep.mubr.bf16.mxu0 0
        %1108 = vmatmul.mubr.bf16.gmra.mrb[0].mxu0 %v875
        %v1109 = vpop.f32.mrb[0].mxu0
        %v1110 = vadd.f32 0.0, %v1109
        %v1111 = vpop.f32.mrb[0].mxu0
        %v1112 = vadd.f32 0.0, %v1111
        %v1113 = vpop.f32.mrb[0].mxu0
        %v1114 = vadd.f32 0.0, %v1113
        %v1115 = vpop.f32.mrb[0].mxu0
        %v1116 = vadd.f32 0.0, %v1115
        %1117 = vdwg.mxu0
        %v1118 = vld [vmem:[#allocation2] sm:$0xff]
        %v1119 = vld [vmem:[#allocation2 + $0x8] sm:$0xff]
        %v1120 = vld [vmem:[#allocation2 + $0x10] sm:$0xff]
        %v1121 = vld [vmem:[#allocation2 + $0x18] sm:$0xff]
        %v1122 = vld [vmem:[#allocation2 + $0x20] sm:$0xff]
        %v1123 = vld [vmem:[#allocation2 + $0x28] sm:$0xff]
        %v1124 = vld [vmem:[#allocation2 + $0x30] sm:$0xff]
        %v1125 = vld [vmem:[#allocation2 + $0x38] sm:$0xff]
        %v1126 = vld [vmem:[#allocation2 + $0x40] sm:$0xff]
        %v1127 = vld [vmem:[#allocation2 + $0x48] sm:$0xff]
        %v1128 = vld [vmem:[#allocation2 + $0x50] sm:$0xff]
        %v1129 = vld [vmem:[#allocation2 + $0x58] sm:$0xff]
        %v1130 = vld [vmem:[#allocation2 + $0x60] sm:$0xff]
        %v1131 = vld [vmem:[#allocation2 + $0x68] sm:$0xff]
        %v1132 = vld [vmem:[#allocation2 + $0x70] sm:$0xff]
        %v1133 = vld [vmem:[#allocation2 + $0x78] sm:$0xff]
        %v1134 = vld [vmem:[#allocation2 + $0x80] sm:$0xff]
        %v1135 = vld [vmem:[#allocation2 + $0x88] sm:$0xff]
        %v1136 = vld [vmem:[#allocation2 + $0x90] sm:$0xff]
        %v1137 = vld [vmem:[#allocation2 + $0x98] sm:$0xff]
        %v1138 = vld [vmem:[#allocation2 + $0xa0] sm:$0xff]
        %v1139 = vld [vmem:[#allocation2 + $0xa8] sm:$0xff]
        %v1140 = vld [vmem:[#allocation2 + $0xb0] sm:$0xff]
        %v1141 = vld [vmem:[#allocation2 + $0xb8] sm:$0xff]
        %v1142 = vld [vmem:[#allocation2 + $0xc0] sm:$0xff]
        %v1143 = vld [vmem:[#allocation2 + $0xc8] sm:$0xff]
        %v1144 = vld [vmem:[#allocation2 + $0xd0] sm:$0xff]
        %v1145 = vld [vmem:[#allocation2 + $0xd8] sm:$0xff]
        %v1146 = vld [vmem:[#allocation2 + $0xe0] sm:$0xff]
        %v1147 = vld [vmem:[#allocation2 + $0xe8] sm:$0xff]
        %v1148 = vld [vmem:[#allocation2 + $0xf0] sm:$0xff]
        %v1149 = vld [vmem:[#allocation2 + $0xf8] sm:$0xff]
        %v1150 = vmax.f32 %v960, %v962
        %1151 = vmax.xlane.f32.xlu0 %v1150
        %v1152 = vpop.xlane.xlu0 %1151
        %v1153 = vmax.f32 %v964, %v966
        %1154 = vmax.xlane.f32.xlu0 %v1153
        %v1155 = vpop.xlane.xlu0 %1154
        %v1156 = vmax.f32 %v970, %v972
        %1157 = vmax.xlane.f32.xlu0 %v1156
        %v1158 = vpop.xlane.xlu0 %1157
        %v1159 = vmax.f32 %v974, %v976
        %1160 = vmax.xlane.f32.xlu0 %v1159
        %v1161 = vpop.xlane.xlu0 %1160
        %v1162 = vmax.f32 %v980, %v982
        %1163 = vmax.xlane.f32.xlu0 %v1162
        %v1164 = vpop.xlane.xlu0 %1163
        %v1165 = vmax.f32 %v984, %v986
        %1166 = vmax.xlane.f32.xlu0 %v1165
        %v1167 = vpop.xlane.xlu0 %1166
        %v1168 = vmax.f32 %v990, %v992
        %1169 = vmax.xlane.f32.xlu0 %v1168
        %v1170 = vpop.xlane.xlu0 %1169
        %v1171 = vmax.f32 %v994, %v996
        %1172 = vmax.xlane.f32.xlu0 %v1171
        %v1173 = vpop.xlane.xlu0 %1172
        %v1174 = vmax.f32 %v1000, %v1002
        %1175 = vmax.xlane.f32.xlu0 %v1174
        %v1176 = vpop.xlane.xlu0 %1175
        %v1177 = vmax.f32 %v1004, %v1006
        %1178 = vmax.xlane.f32.xlu0 %v1177
        %v1179 = vpop.xlane.xlu0 %1178
        %v1180 = vmax.f32 %v1010, %v1012
        %1181 = vmax.xlane.f32.xlu0 %v1180
        %v1182 = vpop.xlane.xlu0 %1181
        %v1183 = vmax.f32 %v1014, %v1016
        %1184 = vmax.xlane.f32.xlu0 %v1183
        %v1185 = vpop.xlane.xlu0 %1184
        %v1186 = vmax.f32 %v1020, %v1022
        %1187 = vmax.xlane.f32.xlu0 %v1186
        %v1188 = vpop.xlane.xlu0 %1187
        %v1189 = vmax.f32 %v1024, %v1026
        %1190 = vmax.xlane.f32.xlu0 %v1189
        %v1191 = vpop.xlane.xlu0 %1190
        %v1192 = vmax.f32 %v1030, %v1032
        %1193 = vmax.xlane.f32.xlu0 %v1192
        %v1194 = vpop.xlane.xlu0 %1193
        %v1195 = vmax.f32 %v1034, %v1036
        %1196 = vmax.xlane.f32.xlu0 %v1195
        %v1197 = vpop.xlane.xlu0 %1196
        %v1198 = vmax.f32 %v1040, %v1042
        %1199 = vmax.xlane.f32.xlu0 %v1198
        %v1200 = vpop.xlane.xlu0 %1199
        %v1201 = vmax.f32 %v1044, %v1046
        %1202 = vmax.xlane.f32.xlu0 %v1201
        %v1203 = vpop.xlane.xlu0 %1202
        %v1204 = vmax.f32 %v1050, %v1052
        %1205 = vmax.xlane.f32.xlu0 %v1204
        %v1206 = vpop.xlane.xlu0 %1205
        %v1207 = vmax.f32 %v1054, %v1056
        %1208 = vmax.xlane.f32.xlu0 %v1207
        %v1209 = vpop.xlane.xlu0 %1208
        %v1210 = vmax.f32 %v1060, %v1062
        %1211 = vmax.xlane.f32.xlu0 %v1210
        %v1212 = vpop.xlane.xlu0 %1211
        %v1213 = vmax.f32 %v1064, %v1066
        %1214 = vmax.xlane.f32.xlu0 %v1213
        %v1215 = vpop.xlane.xlu0 %1214
        %v1216 = vmax.f32 %v1070, %v1072
        %1217 = vmax.xlane.f32.xlu0 %v1216
        %v1218 = vpop.xlane.xlu0 %1217
        %v1219 = vmax.f32 %v1074, %v1076
        %1220 = vmax.xlane.f32.xlu0 %v1219
        %v1221 = vpop.xlane.xlu0 %1220
        %v1222 = vmax.f32 %v1080, %v1082
        %1223 = vmax.xlane.f32.xlu0 %v1222
        %v1224 = vpop.xlane.xlu0 %1223
        %v1225 = vmax.f32 %v1084, %v1086
        %1226 = vmax.xlane.f32.xlu0 %v1225
        %v1227 = vpop.xlane.xlu0 %1226
        %v1228 = vmax.f32 %v1090, %v1092
        %1229 = vmax.xlane.f32.xlu0 %v1228
        %v1230 = vpop.xlane.xlu0 %1229
        %v1231 = vmax.f32 %v1094, %v1096
        %1232 = vmax.xlane.f32.xlu0 %v1231
        %v1233 = vpop.xlane.xlu0 %1232
        %v1234 = vmax.f32 %v1100, %v1102
        %1235 = vmax.xlane.f32.xlu0 %v1234
        %v1236 = vpop.xlane.xlu0 %1235
        %v1237 = vmax.f32 %v1104, %v1106
        %1238 = vmax.xlane.f32.xlu0 %v1237
        %v1239 = vpop.xlane.xlu0 %1238
        %v1240 = vmax.f32 %v1110, %v1112
        %1241 = vmax.xlane.f32.xlu0 %v1240
        %v1242 = vpop.xlane.xlu0 %1241
        %v1243 = vmax.f32 %v1114, %v1116
        %1244 = vmax.xlane.f32.xlu0 %v1243
        %v1245 = vpop.xlane.xlu0 %1244
        %v1246 = vmax.f32 %v1118, %v1152
        %v1247 = vmax.f32 %v1119, %v1155
        %v1248 = vmax.f32 %v1120, %v1158
        %v1249 = vmax.f32 %v1121, %v1161
        %v1250 = vmax.f32 %v1122, %v1164
        %v1251 = vmax.f32 %v1123, %v1167
        %v1252 = vmax.f32 %v1124, %v1170
        %v1253 = vmax.f32 %v1125, %v1173
        %v1254 = vmax.f32 %v1126, %v1176
        %v1255 = vmax.f32 %v1127, %v1179
        %v1256 = vmax.f32 %v1128, %v1182
        %v1257 = vmax.f32 %v1129, %v1185
        %v1258 = vmax.f32 %v1130, %v1188
        %v1259 = vmax.f32 %v1131, %v1191
        %v1260 = vmax.f32 %v1132, %v1194
        %v1261 = vmax.f32 %v1133, %v1197
        %v1262 = vmax.f32 %v1134, %v1200
        %v1263 = vmax.f32 %v1135, %v1203
        %v1264 = vmax.f32 %v1136, %v1206
        %v1265 = vmax.f32 %v1137, %v1209
        %v1266 = vmax.f32 %v1138, %v1212
        %v1267 = vmax.f32 %v1139, %v1215
        %v1268 = vmax.f32 %v1140, %v1218
        %v1269 = vmax.f32 %v1141, %v1221
        %v1270 = vmax.f32 %v1142, %v1224
        %v1271 = vmax.f32 %v1143, %v1227
        %v1272 = vmax.f32 %v1144, %v1230
        %v1273 = vmax.f32 %v1145, %v1233
        %v1274 = vmax.f32 %v1146, %v1236
        %v1275 = vmax.f32 %v1147, %v1239
        %v1276 = vmax.f32 %v1148, %v1242
        %v1277 = vmax.f32 %v1149, %v1245
        %v1278 = vsub.f32 %v1118, %v1246
        %v1279 = vsub.f32 %v1119, %v1247
        %v1280 = vsub.f32 %v1120, %v1248
        %v1281 = vsub.f32 %v1121, %v1249
        %v1282 = vsub.f32 %v1122, %v1250
        %v1283 = vsub.f32 %v1123, %v1251
        %v1284 = vsub.f32 %v1124, %v1252
        %v1285 = vsub.f32 %v1125, %v1253
        %v1286 = vsub.f32 %v1126, %v1254
        %v1287 = vsub.f32 %v1127, %v1255
        %v1288 = vsub.f32 %v1128, %v1256
        %v1289 = vsub.f32 %v1129, %v1257
        %v1290 = vsub.f32 %v1130, %v1258
        %v1291 = vsub.f32 %v1131, %v1259
        %v1292 = vsub.f32 %v1132, %v1260
        %v1293 = vsub.f32 %v1133, %v1261
        %v1294 = vsub.f32 %v1134, %v1262
        %v1295 = vsub.f32 %v1135, %v1263
        %v1296 = vsub.f32 %v1136, %v1264
        %v1297 = vsub.f32 %v1137, %v1265
        %v1298 = vsub.f32 %v1138, %v1266
        %v1299 = vsub.f32 %v1139, %v1267
        %v1300 = vsub.f32 %v1140, %v1268
        %v1301 = vsub.f32 %v1141, %v1269
        %v1302 = vsub.f32 %v1142, %v1270
        %v1303 = vsub.f32 %v1143, %v1271
        %v1304 = vsub.f32 %v1144, %v1272
        %v1305 = vsub.f32 %v1145, %v1273
        %v1306 = vsub.f32 %v1146, %v1274
        %v1307 = vsub.f32 %v1147, %v1275
        %v1308 = vsub.f32 %v1148, %v1276
        %v1309 = vsub.f32 %v1149, %v1277
        %v1310 = vmul.f32 %v1278, 1.442695
        %v1311 = vpow.pop %v1310
        %v1312 = vmul.f32 %v1279, 1.442695
        %v1313 = vpow.pop %v1312
        %v1314 = vmul.f32 %v1280, 1.442695
        %v1315 = vpow.pop %v1314
        %v1316 = vmul.f32 %v1281, 1.442695
        %v1317 = vpow.pop %v1316
        %v1318 = vmul.f32 %v1282, 1.442695
        %v1319 = vpow.pop %v1318
        %v1320 = vmul.f32 %v1283, 1.442695
        %v1321 = vpow.pop %v1320
        %v1322 = vmul.f32 %v1284, 1.442695
        %v1323 = vpow.pop %v1322
        %v1324 = vmul.f32 %v1285, 1.442695
        %v1325 = vpow.pop %v1324
        %v1326 = vmul.f32 %v1286, 1.442695
        %v1327 = vpow.pop %v1326
        %v1328 = vmul.f32 %v1287, 1.442695
        %v1329 = vpow.pop %v1328
        %v1330 = vmul.f32 %v1288, 1.442695
        %v1331 = vpow.pop %v1330
        %v1332 = vmul.f32 %v1289, 1.442695
        %v1333 = vpow.pop %v1332
        %v1334 = vmul.f32 %v1290, 1.442695
        %v1335 = vpow.pop %v1334
        %v1336 = vmul.f32 %v1291, 1.442695
        %v1337 = vpow.pop %v1336
        %v1338 = vmul.f32 %v1292, 1.442695
        %v1339 = vpow.pop %v1338
        %v1340 = vmul.f32 %v1293, 1.442695
        %v1341 = vpow.pop %v1340
        %v1342 = vmul.f32 %v1294, 1.442695
        %v1343 = vpow.pop %v1342
        %v1344 = vmul.f32 %v1295, 1.442695
        %v1345 = vpow.pop %v1344
        %v1346 = vmul.f32 %v1296, 1.442695
        %v1347 = vpow.pop %v1346
        %v1348 = vmul.f32 %v1297, 1.442695
        %v1349 = vpow.pop %v1348
        %v1350 = vmul.f32 %v1298, 1.442695
        %v1351 = vpow.pop %v1350
        %v1352 = vmul.f32 %v1299, 1.442695
        %v1353 = vpow.pop %v1352
        %v1354 = vmul.f32 %v1300, 1.442695
        %v1355 = vpow.pop %v1354
        %v1356 = vmul.f32 %v1301, 1.442695
        %v1357 = vpow.pop %v1356
        %v1358 = vmul.f32 %v1302, 1.442695
        %v1359 = vpow.pop %v1358
        %v1360 = vmul.f32 %v1303, 1.442695
        %v1361 = vpow.pop %v1360
        %v1362 = vmul.f32 %v1304, 1.442695
        %v1363 = vpow.pop %v1362
        %v1364 = vmul.f32 %v1305, 1.442695
        %v1365 = vpow.pop %v1364
        %v1366 = vmul.f32 %v1306, 1.442695
        %v1367 = vpow.pop %v1366
        %v1368 = vmul.f32 %v1307, 1.442695
        %v1369 = vpow.pop %v1368
        %v1370 = vmul.f32 %v1308, 1.442695
        %v1371 = vpow.pop %v1370
        %v1372 = vmul.f32 %v1309, 1.442695
        %v1373 = vpow.pop %v1372
        %1375 = vset.pattern.permute.xlu0 0
        %1376 = vperm.xlu0 %1375, %v1246
        %v1377 = vpop.permute.xlu0 %1376
        %1380 = vset.pattern.permute.xlu0 0
        %1381 = vperm.xlu0 %1380, %v1247
        %v1382 = vpop.permute.xlu0 %1381
        %1385 = vset.pattern.permute.xlu0 0
        %1386 = vperm.xlu0 %1385, %v1248
        %v1387 = vpop.permute.xlu0 %1386
        %1390 = vset.pattern.permute.xlu0 0
        %1391 = vperm.xlu0 %1390, %v1249
        %v1392 = vpop.permute.xlu0 %1391
        %1395 = vset.pattern.permute.xlu0 0
        %1396 = vperm.xlu0 %1395, %v1250
        %v1397 = vpop.permute.xlu0 %1396
        %1400 = vset.pattern.permute.xlu0 0
        %1401 = vperm.xlu0 %1400, %v1251
        %v1402 = vpop.permute.xlu0 %1401
        %1405 = vset.pattern.permute.xlu0 0
        %1406 = vperm.xlu0 %1405, %v1252
        %v1407 = vpop.permute.xlu0 %1406
        %1410 = vset.pattern.permute.xlu0 0
        %1411 = vperm.xlu0 %1410, %v1253
        %v1412 = vpop.permute.xlu0 %1411
        %1415 = vset.pattern.permute.xlu0 0
        %1416 = vperm.xlu0 %1415, %v1254
        %v1417 = vpop.permute.xlu0 %1416
        %1420 = vset.pattern.permute.xlu0 0
        %1421 = vperm.xlu0 %1420, %v1255
        %v1422 = vpop.permute.xlu0 %1421
        %1425 = vset.pattern.permute.xlu0 0
        %1426 = vperm.xlu0 %1425, %v1256
        %v1427 = vpop.permute.xlu0 %1426
        %1430 = vset.pattern.permute.xlu0 0
        %1431 = vperm.xlu0 %1430, %v1257
        %v1432 = vpop.permute.xlu0 %1431
        %1435 = vset.pattern.permute.xlu0 0
        %1436 = vperm.xlu0 %1435, %v1258
        %v1437 = vpop.permute.xlu0 %1436
        %1440 = vset.pattern.permute.xlu0 0
        %1441 = vperm.xlu0 %1440, %v1259
        %v1442 = vpop.permute.xlu0 %1441
        %1445 = vset.pattern.permute.xlu0 0
        %1446 = vperm.xlu0 %1445, %v1260
        %v1447 = vpop.permute.xlu0 %1446
        %1450 = vset.pattern.permute.xlu0 0
        %1451 = vperm.xlu0 %1450, %v1261
        %v1452 = vpop.permute.xlu0 %1451
        %1455 = vset.pattern.permute.xlu0 0
        %1456 = vperm.xlu0 %1455, %v1262
        %v1457 = vpop.permute.xlu0 %1456
        %1460 = vset.pattern.permute.xlu0 0
        %1461 = vperm.xlu0 %1460, %v1263
        %v1462 = vpop.permute.xlu0 %1461
        %1465 = vset.pattern.permute.xlu0 0
        %1466 = vperm.xlu0 %1465, %v1264
        %v1467 = vpop.permute.xlu0 %1466
        %1470 = vset.pattern.permute.xlu0 0
        %1471 = vperm.xlu0 %1470, %v1265
        %v1472 = vpop.permute.xlu0 %1471
        %1475 = vset.pattern.permute.xlu0 0
        %1476 = vperm.xlu0 %1475, %v1266
        %v1477 = vpop.permute.xlu0 %1476
        %1480 = vset.pattern.permute.xlu0 0
        %1481 = vperm.xlu0 %1480, %v1267
        %v1482 = vpop.permute.xlu0 %1481
        %1485 = vset.pattern.permute.xlu0 0
        %1486 = vperm.xlu0 %1485, %v1268
        %v1487 = vpop.permute.xlu0 %1486
        %1490 = vset.pattern.permute.xlu0 0
        %1491 = vperm.xlu0 %1490, %v1269
        %v1492 = vpop.permute.xlu0 %1491
        %1495 = vset.pattern.permute.xlu0 0
        %1496 = vperm.xlu0 %1495, %v1270
        %v1497 = vpop.permute.xlu0 %1496
        %1500 = vset.pattern.permute.xlu0 0
        %1501 = vperm.xlu0 %1500, %v1271
        %v1502 = vpop.permute.xlu0 %1501
        %1505 = vset.pattern.permute.xlu0 0
        %1506 = vperm.xlu0 %1505, %v1272
        %v1507 = vpop.permute.xlu0 %1506
        %1510 = vset.pattern.permute.xlu0 0
        %1511 = vperm.xlu0 %1510, %v1273
        %v1512 = vpop.permute.xlu0 %1511
        %1515 = vset.pattern.permute.xlu0 0
        %1516 = vperm.xlu0 %1515, %v1274
        %v1517 = vpop.permute.xlu0 %1516
        %1520 = vset.pattern.permute.xlu0 0
        %1521 = vperm.xlu0 %1520, %v1275
        %v1522 = vpop.permute.xlu0 %1521
        %1525 = vset.pattern.permute.xlu0 0
        %1526 = vperm.xlu0 %1525, %v1276
        %v1527 = vpop.permute.xlu0 %1526
        %1530 = vset.pattern.permute.xlu0 0
        %1531 = vperm.xlu0 %1530, %v1277
        %v1532 = vpop.permute.xlu0 %1531
        %v1534 = vsub.f32 %v960, %v1377
        %v1535 = vsub.f32 %v962, %v1377
        %v1536 = vsub.f32 %v964, %v1382
        %v1537 = vsub.f32 %v966, %v1382
        %v1538 = vsub.f32 %v970, %v1387
        %v1539 = vsub.f32 %v972, %v1387
        %v1540 = vsub.f32 %v974, %v1392
        %v1541 = vsub.f32 %v976, %v1392
        %v1542 = vsub.f32 %v980, %v1397
        %v1543 = vsub.f32 %v982, %v1397
        %v1544 = vsub.f32 %v984, %v1402
        %v1545 = vsub.f32 %v986, %v1402
        %v1546 = vsub.f32 %v990, %v1407
        %v1547 = vsub.f32 %v992, %v1407
        %v1548 = vsub.f32 %v994, %v1412
        %v1549 = vsub.f32 %v996, %v1412
        %v1550 = vsub.f32 %v1000, %v1417
        %v1551 = vsub.f32 %v1002, %v1417
        %v1552 = vsub.f32 %v1004, %v1422
        %v1553 = vsub.f32 %v1006, %v1422
        %v1554 = vsub.f32 %v1010, %v1427
        %v1555 = vsub.f32 %v1012, %v1427
        %v1556 = vsub.f32 %v1014, %v1432
        %v1557 = vsub.f32 %v1016, %v1432
        %v1558 = vsub.f32 %v1020, %v1437
        %v1559 = vsub.f32 %v1022, %v1437
        %v1560 = vsub.f32 %v1024, %v1442
        %v1561 = vsub.f32 %v1026, %v1442
        %v1562 = vsub.f32 %v1030, %v1447
        %v1563 = vsub.f32 %v1032, %v1447
        %v1564 = vsub.f32 %v1034, %v1452
        %v1565 = vsub.f32 %v1036, %v1452
        %v1566 = vsub.f32 %v1040, %v1457
        %v1567 = vsub.f32 %v1042, %v1457
        %v1568 = vsub.f32 %v1044, %v1462
        %v1569 = vsub.f32 %v1046, %v1462
        %v1570 = vsub.f32 %v1050, %v1467
        %v1571 = vsub.f32 %v1052, %v1467
        %v1572 = vsub.f32 %v1054, %v1472
        %v1573 = vsub.f32 %v1056, %v1472
        %v1574 = vsub.f32 %v1060, %v1477
        %v1575 = vsub.f32 %v1062, %v1477
        %v1576 = vsub.f32 %v1064, %v1482
        %v1577 = vsub.f32 %v1066, %v1482
        %v1578 = vsub.f32 %v1070, %v1487
        %v1579 = vsub.f32 %v1072, %v1487
        %v1580 = vsub.f32 %v1074, %v1492
        %v1581 = vsub.f32 %v1076, %v1492
        %v1582 = vsub.f32 %v1080, %v1497
        %v1583 = vsub.f32 %v1082, %v1497
        %v1584 = vsub.f32 %v1084, %v1502
        %v1585 = vsub.f32 %v1086, %v1502
        %v1586 = vsub.f32 %v1090, %v1507
        %v1587 = vsub.f32 %v1092, %v1507
        %v1588 = vsub.f32 %v1094, %v1512
        %v1589 = vsub.f32 %v1096, %v1512
        %v1590 = vsub.f32 %v1100, %v1517
        %v1591 = vsub.f32 %v1102, %v1517
        %v1592 = vsub.f32 %v1104, %v1522
        %v1593 = vsub.f32 %v1106, %v1522
        %v1594 = vsub.f32 %v1110, %v1527
        %v1595 = vsub.f32 %v1112, %v1527
        %v1596 = vsub.f32 %v1114, %v1532
        %v1597 = vsub.f32 %v1116, %v1532
        %v1598 = vmul.f32 %v1534, 1.442695
        %v1599 = vpow.pop %v1598
        %v1600 = vmul.f32 %v1535, 1.442695
        %v1601 = vpow.pop %v1600
        %v1602 = vmul.f32 %v1536, 1.442695
        %v1603 = vpow.pop %v1602
        %v1604 = vmul.f32 %v1537, 1.442695
        %v1605 = vpow.pop %v1604
        %v1606 = vmul.f32 %v1538, 1.442695
        %v1607 = vpow.pop %v1606
        %v1608 = vmul.f32 %v1539, 1.442695
        %v1609 = vpow.pop %v1608
        %v1610 = vmul.f32 %v1540, 1.442695
        %v1611 = vpow.pop %v1610
        %v1612 = vmul.f32 %v1541, 1.442695
        %v1613 = vpow.pop %v1612
        %v1614 = vmul.f32 %v1542, 1.442695
        %v1615 = vpow.pop %v1614
        %v1616 = vmul.f32 %v1543, 1.442695
        %v1617 = vpow.pop %v1616
        %v1618 = vmul.f32 %v1544, 1.442695
        %v1619 = vpow.pop %v1618
        %v1620 = vmul.f32 %v1545, 1.442695
        %v1621 = vpow.pop %v1620
        %v1622 = vmul.f32 %v1546, 1.442695
        %v1623 = vpow.pop %v1622
        %v1624 = vmul.f32 %v1547, 1.442695
        %v1625 = vpow.pop %v1624
        %v1626 = vmul.f32 %v1548, 1.442695
        %v1627 = vpow.pop %v1626
        %v1628 = vmul.f32 %v1549, 1.442695
        %v1629 = vpow.pop %v1628
        %v1630 = vmul.f32 %v1550, 1.442695
        %v1631 = vpow.pop %v1630
        %v1632 = vmul.f32 %v1551, 1.442695
        %v1633 = vpow.pop %v1632
        %v1634 = vmul.f32 %v1552, 1.442695
        %v1635 = vpow.pop %v1634
        %v1636 = vmul.f32 %v1553, 1.442695
        %v1637 = vpow.pop %v1636
        %v1638 = vmul.f32 %v1554, 1.442695
        %v1639 = vpow.pop %v1638
        %v1640 = vmul.f32 %v1555, 1.442695
        %v1641 = vpow.pop %v1640
        %v1642 = vmul.f32 %v1556, 1.442695
        %v1643 = vpow.pop %v1642
        %v1644 = vmul.f32 %v1557, 1.442695
        %v1645 = vpow.pop %v1644
        %v1646 = vmul.f32 %v1558, 1.442695
        %v1647 = vpow.pop %v1646
        %v1648 = vmul.f32 %v1559, 1.442695
        %v1649 = vpow.pop %v1648
        %v1650 = vmul.f32 %v1560, 1.442695
        %v1651 = vpow.pop %v1650
        %v1652 = vmul.f32 %v1561, 1.442695
        %v1653 = vpow.pop %v1652
        %v1654 = vmul.f32 %v1562, 1.442695
        %v1655 = vpow.pop %v1654
        %v1656 = vmul.f32 %v1563, 1.442695
        %v1657 = vpow.pop %v1656
        %v1658 = vmul.f32 %v1564, 1.442695
        %v1659 = vpow.pop %v1658
        %v1660 = vmul.f32 %v1565, 1.442695
        %v1661 = vpow.pop %v1660
        %v1662 = vmul.f32 %v1566, 1.442695
        %v1663 = vpow.pop %v1662
        %v1664 = vmul.f32 %v1567, 1.442695
        %v1665 = vpow.pop %v1664
        %v1666 = vmul.f32 %v1568, 1.442695
        %v1667 = vpow.pop %v1666
        %v1668 = vmul.f32 %v1569, 1.442695
        %v1669 = vpow.pop %v1668
        %v1670 = vmul.f32 %v1570, 1.442695
        %v1671 = vpow.pop %v1670
        %v1672 = vmul.f32 %v1571, 1.442695
        %v1673 = vpow.pop %v1672
        %v1674 = vmul.f32 %v1572, 1.442695
        %v1675 = vpow.pop %v1674
        %v1676 = vmul.f32 %v1573, 1.442695
        %v1677 = vpow.pop %v1676
        %v1678 = vmul.f32 %v1574, 1.442695
        %v1679 = vpow.pop %v1678
        %v1680 = vmul.f32 %v1575, 1.442695
        %v1681 = vpow.pop %v1680
        %v1682 = vmul.f32 %v1576, 1.442695
        %v1683 = vpow.pop %v1682
        %v1684 = vmul.f32 %v1577, 1.442695
        %v1685 = vpow.pop %v1684
        %v1686 = vmul.f32 %v1578, 1.442695
        %v1687 = vpow.pop %v1686
        %v1688 = vmul.f32 %v1579, 1.442695
        %v1689 = vpow.pop %v1688
        %v1690 = vmul.f32 %v1580, 1.442695
        %v1691 = vpow.pop %v1690
        %v1692 = vmul.f32 %v1581, 1.442695
        %v1693 = vpow.pop %v1692
        %v1694 = vmul.f32 %v1582, 1.442695
        %v1695 = vpow.pop %v1694
        %v1696 = vmul.f32 %v1583, 1.442695
        %v1697 = vpow.pop %v1696
        %v1698 = vmul.f32 %v1584, 1.442695
        %v1699 = vpow.pop %v1698
        %v1700 = vmul.f32 %v1585, 1.442695
        %v1701 = vpow.pop %v1700
        %v1702 = vmul.f32 %v1586, 1.442695
        %v1703 = vpow.pop %v1702
        %v1704 = vmul.f32 %v1587, 1.442695
        %v1705 = vpow.pop %v1704
        %v1706 = vmul.f32 %v1588, 1.442695
        %v1707 = vpow.pop %v1706
        %v1708 = vmul.f32 %v1589, 1.442695
        %v1709 = vpow.pop %v1708
        %v1710 = vmul.f32 %v1590, 1.442695
        %v1711 = vpow.pop %v1710
        %v1712 = vmul.f32 %v1591, 1.442695
        %v1713 = vpow.pop %v1712
        %v1714 = vmul.f32 %v1592, 1.442695
        %v1715 = vpow.pop %v1714
        %v1716 = vmul.f32 %v1593, 1.442695
        %v1717 = vpow.pop %v1716
        %v1718 = vmul.f32 %v1594, 1.442695
        %v1719 = vpow.pop %v1718
        %v1720 = vmul.f32 %v1595, 1.442695
        %v1721 = vpow.pop %v1720
        %v1722 = vmul.f32 %v1596, 1.442695
        %v1723 = vpow.pop %v1722
        %v1724 = vmul.f32 %v1597, 1.442695
        %v1725 = vpow.pop %v1724
        %v1726 = vld [vmem:[#allocation3] sm:$0xff]
        %v1727 = vld [vmem:[#allocation3 + $0x8] sm:$0xff]
        %v1728 = vld [vmem:[#allocation3 + $0x10] sm:$0xff]
        %v1729 = vld [vmem:[#allocation3 + $0x18] sm:$0xff]
        %v1730 = vld [vmem:[#allocation3 + $0x20] sm:$0xff]
        %v1731 = vld [vmem:[#allocation3 + $0x28] sm:$0xff]
        %v1732 = vld [vmem:[#allocation3 + $0x30] sm:$0xff]
        %v1733 = vld [vmem:[#allocation3 + $0x38] sm:$0xff]
        %v1734 = vld [vmem:[#allocation3 + $0x40] sm:$0xff]
        %v1735 = vld [vmem:[#allocation3 + $0x48] sm:$0xff]
        %v1736 = vld [vmem:[#allocation3 + $0x50] sm:$0xff]
        %v1737 = vld [vmem:[#allocation3 + $0x58] sm:$0xff]
        %v1738 = vld [vmem:[#allocation3 + $0x60] sm:$0xff]
        %v1739 = vld [vmem:[#allocation3 + $0x68] sm:$0xff]
        %v1740 = vld [vmem:[#allocation3 + $0x70] sm:$0xff]
        %v1741 = vld [vmem:[#allocation3 + $0x78] sm:$0xff]
        %v1742 = vld [vmem:[#allocation3 + $0x80] sm:$0xff]
        %v1743 = vld [vmem:[#allocation3 + $0x88] sm:$0xff]
        %v1744 = vld [vmem:[#allocation3 + $0x90] sm:$0xff]
        %v1745 = vld [vmem:[#allocation3 + $0x98] sm:$0xff]
        %v1746 = vld [vmem:[#allocation3 + $0xa0] sm:$0xff]
        %v1747 = vld [vmem:[#allocation3 + $0xa8] sm:$0xff]
        %v1748 = vld [vmem:[#allocation3 + $0xb0] sm:$0xff]
        %v1749 = vld [vmem:[#allocation3 + $0xb8] sm:$0xff]
        %v1750 = vld [vmem:[#allocation3 + $0xc0] sm:$0xff]
        %v1751 = vld [vmem:[#allocation3 + $0xc8] sm:$0xff]
        %v1752 = vld [vmem:[#allocation3 + $0xd0] sm:$0xff]
        %v1753 = vld [vmem:[#allocation3 + $0xd8] sm:$0xff]
        %v1754 = vld [vmem:[#allocation3 + $0xe0] sm:$0xff]
        %v1755 = vld [vmem:[#allocation3 + $0xe8] sm:$0xff]
        %v1756 = vld [vmem:[#allocation3 + $0xf0] sm:$0xff]
        %v1757 = vld [vmem:[#allocation3 + $0xf8] sm:$0xff]
        %v1758 = vmul.f32 %v1311, %v1726
        %v1759 = vmul.f32 %v1313, %v1727
        %v1760 = vmul.f32 %v1315, %v1728
        %v1761 = vmul.f32 %v1317, %v1729
        %v1762 = vmul.f32 %v1319, %v1730
        %v1763 = vmul.f32 %v1321, %v1731
        %v1764 = vmul.f32 %v1323, %v1732
        %v1765 = vmul.f32 %v1325, %v1733
        %v1766 = vmul.f32 %v1327, %v1734
        %v1767 = vmul.f32 %v1329, %v1735
        %v1768 = vmul.f32 %v1331, %v1736
        %v1769 = vmul.f32 %v1333, %v1737
        %v1770 = vmul.f32 %v1335, %v1738
        %v1771 = vmul.f32 %v1337, %v1739
        %v1772 = vmul.f32 %v1339, %v1740
        %v1773 = vmul.f32 %v1341, %v1741
        %v1774 = vmul.f32 %v1343, %v1742
        %v1775 = vmul.f32 %v1345, %v1743
        %v1776 = vmul.f32 %v1347, %v1744
        %v1777 = vmul.f32 %v1349, %v1745
        %v1778 = vmul.f32 %v1351, %v1746
        %v1779 = vmul.f32 %v1353, %v1747
        %v1780 = vmul.f32 %v1355, %v1748
        %v1781 = vmul.f32 %v1357, %v1749
        %v1782 = vmul.f32 %v1359, %v1750
        %v1783 = vmul.f32 %v1361, %v1751
        %v1784 = vmul.f32 %v1363, %v1752
        %v1785 = vmul.f32 %v1365, %v1753
        %v1786 = vmul.f32 %v1367, %v1754
        %v1787 = vmul.f32 %v1369, %v1755
        %v1788 = vmul.f32 %v1371, %v1756
        %v1789 = vmul.f32 %v1373, %v1757
        %v1790 = vadd.f32 %v1599, %v1601
        %1791 = vadd.xlane.f32.xlu0 %v1790
        %v1792 = vpop.xlane.xlu0 %1791
        %v1793 = vadd.f32 %v1603, %v1605
        %1794 = vadd.xlane.f32.xlu0 %v1793
        %v1795 = vpop.xlane.xlu0 %1794
        %v1796 = vadd.f32 %v1607, %v1609
        %1797 = vadd.xlane.f32.xlu0 %v1796
        %v1798 = vpop.xlane.xlu0 %1797
        %v1799 = vadd.f32 %v1611, %v1613
        %1800 = vadd.xlane.f32.xlu0 %v1799
        %v1801 = vpop.xlane.xlu0 %1800
        %v1802 = vadd.f32 %v1615, %v1617
        %1803 = vadd.xlane.f32.xlu0 %v1802
        %v1804 = vpop.xlane.xlu0 %1803
        %v1805 = vadd.f32 %v1619, %v1621
        %1806 = vadd.xlane.f32.xlu0 %v1805
        %v1807 = vpop.xlane.xlu0 %1806
        %v1808 = vadd.f32 %v1623, %v1625
        %1809 = vadd.xlane.f32.xlu0 %v1808
        %v1810 = vpop.xlane.xlu0 %1809
        %v1811 = vadd.f32 %v1627, %v1629
        %1812 = vadd.xlane.f32.xlu0 %v1811
        %v1813 = vpop.xlane.xlu0 %1812
        %v1814 = vadd.f32 %v1631, %v1633
        %1815 = vadd.xlane.f32.xlu0 %v1814
        %v1816 = vpop.xlane.xlu0 %1815
        %v1817 = vadd.f32 %v1635, %v1637
        %1818 = vadd.xlane.f32.xlu0 %v1817
        %v1819 = vpop.xlane.xlu0 %1818
        %v1820 = vadd.f32 %v1639, %v1641
        %1821 = vadd.xlane.f32.xlu0 %v1820
        %v1822 = vpop.xlane.xlu0 %1821
        %v1823 = vadd.f32 %v1643, %v1645
        %1824 = vadd.xlane.f32.xlu0 %v1823
        %v1825 = vpop.xlane.xlu0 %1824
        %v1826 = vadd.f32 %v1647, %v1649
        %1827 = vadd.xlane.f32.xlu0 %v1826
        %v1828 = vpop.xlane.xlu0 %1827
        %v1829 = vadd.f32 %v1651, %v1653
        %1830 = vadd.xlane.f32.xlu0 %v1829
        %v1831 = vpop.xlane.xlu0 %1830
        %v1832 = vadd.f32 %v1655, %v1657
        %1833 = vadd.xlane.f32.xlu0 %v1832
        %v1834 = vpop.xlane.xlu0 %1833
        %v1835 = vadd.f32 %v1659, %v1661
        %1836 = vadd.xlane.f32.xlu0 %v1835
        %v1837 = vpop.xlane.xlu0 %1836
        %v1838 = vadd.f32 %v1663, %v1665
        %1839 = vadd.xlane.f32.xlu0 %v1838
        %v1840 = vpop.xlane.xlu0 %1839
        %v1841 = vadd.f32 %v1667, %v1669
        %1842 = vadd.xlane.f32.xlu0 %v1841
        %v1843 = vpop.xlane.xlu0 %1842
        %v1844 = vadd.f32 %v1671, %v1673
        %1845 = vadd.xlane.f32.xlu0 %v1844
        %v1846 = vpop.xlane.xlu0 %1845
        %v1847 = vadd.f32 %v1675, %v1677
        %1848 = vadd.xlane.f32.xlu0 %v1847
        %v1849 = vpop.xlane.xlu0 %1848
        %v1850 = vadd.f32 %v1679, %v1681
        %1851 = vadd.xlane.f32.xlu0 %v1850
        %v1852 = vpop.xlane.xlu0 %1851
        %v1853 = vadd.f32 %v1683, %v1685
        %1854 = vadd.xlane.f32.xlu0 %v1853
        %v1855 = vpop.xlane.xlu0 %1854
        %v1856 = vadd.f32 %v1687, %v1689
        %1857 = vadd.xlane.f32.xlu0 %v1856
        %v1858 = vpop.xlane.xlu0 %1857
        %v1859 = vadd.f32 %v1691, %v1693
        %1860 = vadd.xlane.f32.xlu0 %v1859
        %v1861 = vpop.xlane.xlu0 %1860
        %v1862 = vadd.f32 %v1695, %v1697
        %1863 = vadd.xlane.f32.xlu0 %v1862
        %v1864 = vpop.xlane.xlu0 %1863
        %v1865 = vadd.f32 %v1699, %v1701
        %1866 = vadd.xlane.f32.xlu0 %v1865
        %v1867 = vpop.xlane.xlu0 %1866
        %v1868 = vadd.f32 %v1703, %v1705
        %1869 = vadd.xlane.f32.xlu0 %v1868
        %v1870 = vpop.xlane.xlu0 %1869
        %v1871 = vadd.f32 %v1707, %v1709
        %1872 = vadd.xlane.f32.xlu0 %v1871
        %v1873 = vpop.xlane.xlu0 %1872
        %v1874 = vadd.f32 %v1711, %v1713
        %1875 = vadd.xlane.f32.xlu0 %v1874
        %v1876 = vpop.xlane.xlu0 %1875
        %v1877 = vadd.f32 %v1715, %v1717
        %1878 = vadd.xlane.f32.xlu0 %v1877
        %v1879 = vpop.xlane.xlu0 %1878
        %v1880 = vadd.f32 %v1719, %v1721
        %1881 = vadd.xlane.f32.xlu0 %v1880
        %v1882 = vpop.xlane.xlu0 %1881
        %v1883 = vadd.f32 %v1723, %v1725
        %1884 = vadd.xlane.f32.xlu0 %v1883
        %v1885 = vpop.xlane.xlu0 %1884
        %v1886 = vadd.f32 %v1758, %v1792
        %v1887 = vadd.f32 %v1759, %v1795
        %v1888 = vadd.f32 %v1760, %v1798
        %v1889 = vadd.f32 %v1761, %v1801
        %v1890 = vadd.f32 %v1762, %v1804
        %v1891 = vadd.f32 %v1763, %v1807
        %v1892 = vadd.f32 %v1764, %v1810
        %v1893 = vadd.f32 %v1765, %v1813
        %v1894 = vadd.f32 %v1766, %v1816
        %v1895 = vadd.f32 %v1767, %v1819
        %v1896 = vadd.f32 %v1768, %v1822
        %v1897 = vadd.f32 %v1769, %v1825
        %v1898 = vadd.f32 %v1770, %v1828
        %v1899 = vadd.f32 %v1771, %v1831
        %v1900 = vadd.f32 %v1772, %v1834
        %v1901 = vadd.f32 %v1773, %v1837
        %v1902 = vadd.f32 %v1774, %v1840
        %v1903 = vadd.f32 %v1775, %v1843
        %v1904 = vadd.f32 %v1776, %v1846
        %v1905 = vadd.f32 %v1777, %v1849
        %v1906 = vadd.f32 %v1778, %v1852
        %v1907 = vadd.f32 %v1779, %v1855
        %v1908 = vadd.f32 %v1780, %v1858
        %v1909 = vadd.f32 %v1781, %v1861
        %v1910 = vadd.f32 %v1782, %v1864
        %v1911 = vadd.f32 %v1783, %v1867
        %v1912 = vadd.f32 %v1784, %v1870
        %v1913 = vadd.f32 %v1785, %v1873
        %v1914 = vadd.f32 %v1786, %v1876
        %v1915 = vadd.f32 %v1787, %v1879
        %v1916 = vadd.f32 %v1788, %v1882
        %v1917 = vadd.f32 %v1789, %v1885
        %vm1918 = vcmask 7168
        %1919 = vst.msk [vmem:[#allocation3] sm:$0xff] %vm1918, %v1886
        %1920 = vst.msk [vmem:[#allocation3 + $0x8] sm:$0xff] %vm1918, %v1887
        %1921 = vst.msk [vmem:[#allocation3 + $0x10] sm:$0xff] %vm1918, %v1888
        %1922 = vst.msk [vmem:[#allocation3 + $0x18] sm:$0xff] %vm1918, %v1889
        %1923 = vst.msk [vmem:[#allocation3 + $0x20] sm:$0xff] %vm1918, %v1890
        %1924 = vst.msk [vmem:[#allocation3 + $0x28] sm:$0xff] %vm1918, %v1891
        %1925 = vst.msk [vmem:[#allocation3 + $0x30] sm:$0xff] %vm1918, %v1892
        %1926 = vst.msk [vmem:[#allocation3 + $0x38] sm:$0xff] %vm1918, %v1893
        %1927 = vst.msk [vmem:[#allocation3 + $0x40] sm:$0xff] %vm1918, %v1894
        %1928 = vst.msk [vmem:[#allocation3 + $0x48] sm:$0xff] %vm1918, %v1895
        %1929 = vst.msk [vmem:[#allocation3 + $0x50] sm:$0xff] %vm1918, %v1896
        %1930 = vst.msk [vmem:[#allocation3 + $0x58] sm:$0xff] %vm1918, %v1897
        %1931 = vst.msk [vmem:[#allocation3 + $0x60] sm:$0xff] %vm1918, %v1898
        %1932 = vst.msk [vmem:[#allocation3 + $0x68] sm:$0xff] %vm1918, %v1899
        %1933 = vst.msk [vmem:[#allocation3 + $0x70] sm:$0xff] %vm1918, %v1900
        %1934 = vst.msk [vmem:[#allocation3 + $0x78] sm:$0xff] %vm1918, %v1901
        %1935 = vst.msk [vmem:[#allocation3 + $0x80] sm:$0xff] %vm1918, %v1902
        %1936 = vst.msk [vmem:[#allocation3 + $0x88] sm:$0xff] %vm1918, %v1903
        %1937 = vst.msk [vmem:[#allocation3 + $0x90] sm:$0xff] %vm1918, %v1904
        %1938 = vst.msk [vmem:[#allocation3 + $0x98] sm:$0xff] %vm1918, %v1905
        %1939 = vst.msk [vmem:[#allocation3 + $0xa0] sm:$0xff] %vm1918, %v1906
        %1940 = vst.msk [vmem:[#allocation3 + $0xa8] sm:$0xff] %vm1918, %v1907
        %1941 = vst.msk [vmem:[#allocation3 + $0xb0] sm:$0xff] %vm1918, %v1908
        %1942 = vst.msk [vmem:[#allocation3 + $0xb8] sm:$0xff] %vm1918, %v1909
        %1943 = vst.msk [vmem:[#allocation3 + $0xc0] sm:$0xff] %vm1918, %v1910
        %1944 = vst.msk [vmem:[#allocation3 + $0xc8] sm:$0xff] %vm1918, %v1911
        %1945 = vst.msk [vmem:[#allocation3 + $0xd0] sm:$0xff] %vm1918, %v1912
        %1946 = vst.msk [vmem:[#allocation3 + $0xd8] sm:$0xff] %vm1918, %v1913
        %1947 = vst.msk [vmem:[#allocation3 + $0xe0] sm:$0xff] %vm1918, %v1914
        %1948 = vst.msk [vmem:[#allocation3 + $0xe8] sm:$0xff] %vm1918, %v1915
        %1949 = vst.msk [vmem:[#allocation3 + $0xf0] sm:$0xff] %vm1918, %v1916
        %1950 = vst.msk [vmem:[#allocation3 + $0xf8] sm:$0xff] %vm1918, %v1917
        %v1951 = vld [vmem:[#allocation4] sm:$0xff]
        %v1952 = vld [vmem:[#allocation4 + $0x8] sm:$0xff]
        %v1953 = vld [vmem:[#allocation4 + $0x10] sm:$0xff]
        %v1954 = vld [vmem:[#allocation4 + $0x18] sm:$0xff]
        %v1955 = vld [vmem:[#allocation4 + $0x20] sm:$0xff]
        %v1956 = vld [vmem:[#allocation4 + $0x28] sm:$0xff]
        %v1957 = vld [vmem:[#allocation4 + $0x30] sm:$0xff]
        %v1958 = vld [vmem:[#allocation4 + $0x38] sm:$0xff]
        %v1959 = vld [vmem:[#allocation4 + $0x40] sm:$0xff]
        %v1960 = vld [vmem:[#allocation4 + $0x48] sm:$0xff]
        %v1961 = vld [vmem:[#allocation4 + $0x50] sm:$0xff]
        %v1962 = vld [vmem:[#allocation4 + $0x58] sm:$0xff]
        %v1963 = vld [vmem:[#allocation4 + $0x60] sm:$0xff]
        %v1964 = vld [vmem:[#allocation4 + $0x68] sm:$0xff]
        %v1965 = vld [vmem:[#allocation4 + $0x70] sm:$0xff]
        %v1966 = vld [vmem:[#allocation4 + $0x78] sm:$0xff]
        %v1967 = vld [vmem:[#allocation4 + $0x80] sm:$0xff]
        %v1968 = vld [vmem:[#allocation4 + $0x88] sm:$0xff]
        %v1969 = vld [vmem:[#allocation4 + $0x90] sm:$0xff]
        %v1970 = vld [vmem:[#allocation4 + $0x98] sm:$0xff]
        %v1971 = vld [vmem:[#allocation4 + $0xa0] sm:$0xff]
        %v1972 = vld [vmem:[#allocation4 + $0xa8] sm:$0xff]
        %v1973 = vld [vmem:[#allocation4 + $0xb0] sm:$0xff]
        %v1974 = vld [vmem:[#allocation4 + $0xb8] sm:$0xff]
        %v1975 = vld [vmem:[#allocation4 + $0xc0] sm:$0xff]
        %v1976 = vld [vmem:[#allocation4 + $0xc8] sm:$0xff]
        %v1977 = vld [vmem:[#allocation4 + $0xd0] sm:$0xff]
        %v1978 = vld [vmem:[#allocation4 + $0xd8] sm:$0xff]
        %v1979 = vld [vmem:[#allocation4 + $0xe0] sm:$0xff]
        %v1980 = vld [vmem:[#allocation4 + $0xe8] sm:$0xff]
        %v1981 = vld [vmem:[#allocation4 + $0xf0] sm:$0xff]
        %v1982 = vld [vmem:[#allocation4 + $0xf8] sm:$0xff]
        %1984 = vset.pattern.permute.xlu0 0
        %1985 = vperm.xlu0 %1984, %v1311
        %v1986 = vpop.permute.xlu0 %1985
        %1989 = vset.pattern.permute.xlu0 0
        %1990 = vperm.xlu0 %1989, %v1313
        %v1991 = vpop.permute.xlu0 %1990
        %1994 = vset.pattern.permute.xlu0 0
        %1995 = vperm.xlu0 %1994, %v1315
        %v1996 = vpop.permute.xlu0 %1995
        %1999 = vset.pattern.permute.xlu0 0
        %2000 = vperm.xlu0 %1999, %v1317
        %v2001 = vpop.permute.xlu0 %2000
        %2004 = vset.pattern.permute.xlu0 0
        %2005 = vperm.xlu0 %2004, %v1319
        %v2006 = vpop.permute.xlu0 %2005
        %2009 = vset.pattern.permute.xlu0 0
        %2010 = vperm.xlu0 %2009, %v1321
        %v2011 = vpop.permute.xlu0 %2010
        %2014 = vset.pattern.permute.xlu0 0
        %2015 = vperm.xlu0 %2014, %v1323
        %v2016 = vpop.permute.xlu0 %2015
        %2019 = vset.pattern.permute.xlu0 0
        %2020 = vperm.xlu0 %2019, %v1325
        %v2021 = vpop.permute.xlu0 %2020
        %2024 = vset.pattern.permute.xlu0 0
        %2025 = vperm.xlu0 %2024, %v1327
        %v2026 = vpop.permute.xlu0 %2025
        %2029 = vset.pattern.permute.xlu0 0
        %2030 = vperm.xlu0 %2029, %v1329
        %v2031 = vpop.permute.xlu0 %2030
        %2034 = vset.pattern.permute.xlu0 0
        %2035 = vperm.xlu0 %2034, %v1331
        %v2036 = vpop.permute.xlu0 %2035
        %2039 = vset.pattern.permute.xlu0 0
        %2040 = vperm.xlu0 %2039, %v1333
        %v2041 = vpop.permute.xlu0 %2040
        %2044 = vset.pattern.permute.xlu0 0
        %2045 = vperm.xlu0 %2044, %v1335
        %v2046 = vpop.permute.xlu0 %2045
        %2049 = vset.pattern.permute.xlu0 0
        %2050 = vperm.xlu0 %2049, %v1337
        %v2051 = vpop.permute.xlu0 %2050
        %2054 = vset.pattern.permute.xlu0 0
        %2055 = vperm.xlu0 %2054, %v1339
        %v2056 = vpop.permute.xlu0 %2055
        %2059 = vset.pattern.permute.xlu0 0
        %2060 = vperm.xlu0 %2059, %v1341
        %v2061 = vpop.permute.xlu0 %2060
        %2064 = vset.pattern.permute.xlu0 0
        %2065 = vperm.xlu0 %2064, %v1343
        %v2066 = vpop.permute.xlu0 %2065
        %2069 = vset.pattern.permute.xlu0 0
        %2070 = vperm.xlu0 %2069, %v1345
        %v2071 = vpop.permute.xlu0 %2070
        %2074 = vset.pattern.permute.xlu0 0
        %2075 = vperm.xlu0 %2074, %v1347
        %v2076 = vpop.permute.xlu0 %2075
        %2079 = vset.pattern.permute.xlu0 0
        %2080 = vperm.xlu0 %2079, %v1349
        %v2081 = vpop.permute.xlu0 %2080
        %2084 = vset.pattern.permute.xlu0 0
        %2085 = vperm.xlu0 %2084, %v1351
        %v2086 = vpop.permute.xlu0 %2085
        %2089 = vset.pattern.permute.xlu0 0
        %2090 = vperm.xlu0 %2089, %v1353
        %v2091 = vpop.permute.xlu0 %2090
        %2094 = vset.pattern.permute.xlu0 0
        %2095 = vperm.xlu0 %2094, %v1355
        %v2096 = vpop.permute.xlu0 %2095
        %2099 = vset.pattern.permute.xlu0 0
        %2100 = vperm.xlu0 %2099, %v1357
        %v2101 = vpop.permute.xlu0 %2100
        %2104 = vset.pattern.permute.xlu0 0
        %2105 = vperm.xlu0 %2104, %v1359
        %v2106 = vpop.permute.xlu0 %2105
        %2109 = vset.pattern.permute.xlu0 0
        %2110 = vperm.xlu0 %2109, %v1361
        %v2111 = vpop.permute.xlu0 %2110
        %2114 = vset.pattern.permute.xlu0 0
        %2115 = vperm.xlu0 %2114, %v1363
        %v2116 = vpop.permute.xlu0 %2115
        %2119 = vset.pattern.permute.xlu0 0
        %2120 = vperm.xlu0 %2119, %v1365
        %v2121 = vpop.permute.xlu0 %2120
        %2124 = vset.pattern.permute.xlu0 0
        %2125 = vperm.xlu0 %2124, %v1367
        %v2126 = vpop.permute.xlu0 %2125
        %2129 = vset.pattern.permute.xlu0 0
        %2130 = vperm.xlu0 %2129, %v1369
        %v2131 = vpop.permute.xlu0 %2130
        %2134 = vset.pattern.permute.xlu0 0
        %2135 = vperm.xlu0 %2134, %v1371
        %v2136 = vpop.permute.xlu0 %2135
        %2139 = vset.pattern.permute.xlu0 0
        %2140 = vperm.xlu0 %2139, %v1373
        %v2141 = vpop.permute.xlu0 %2140
        %v2143 = vmul.f32 %v1986, %v1951
        %v2144 = vmul.f32 %v1991, %v1952
        %v2145 = vmul.f32 %v1996, %v1953
        %v2146 = vmul.f32 %v2001, %v1954
        %v2147 = vmul.f32 %v2006, %v1955
        %v2148 = vmul.f32 %v2011, %v1956
        %v2149 = vmul.f32 %v2016, %v1957
        %v2150 = vmul.f32 %v2021, %v1958
        %v2151 = vmul.f32 %v2026, %v1959
        %v2152 = vmul.f32 %v2031, %v1960
        %v2153 = vmul.f32 %v2036, %v1961
        %v2154 = vmul.f32 %v2041, %v1962
        %v2155 = vmul.f32 %v2046, %v1963
        %v2156 = vmul.f32 %v2051, %v1964
        %v2157 = vmul.f32 %v2056, %v1965
        %v2158 = vmul.f32 %v2061, %v1966
        %v2159 = vmul.f32 %v2066, %v1967
        %v2160 = vmul.f32 %v2071, %v1968
        %v2161 = vmul.f32 %v2076, %v1969
        %v2162 = vmul.f32 %v2081, %v1970
        %v2163 = vmul.f32 %v2086, %v1971
        %v2164 = vmul.f32 %v2091, %v1972
        %v2165 = vmul.f32 %v2096, %v1973
        %v2166 = vmul.f32 %v2101, %v1974
        %v2167 = vmul.f32 %v2106, %v1975
        %v2168 = vmul.f32 %v2111, %v1976
        %v2169 = vmul.f32 %v2116, %v1977
        %v2170 = vmul.f32 %v2121, %v1978
        %v2171 = vmul.f32 %v2126, %v1979
        %v2172 = vmul.f32 %v2131, %v1980
        %v2173 = vmul.f32 %v2136, %v1981
        %v2174 = vmul.f32 %v2141, %v1982
        %v2175 = vpack.c.bf16 %v1603, %v1599
        %v2176 = vpack.c.bf16 %v1605, %v1601
        %v2177 = vpack.c.bf16 %v1611, %v1607
        %v2178 = vpack.c.bf16 %v1613, %v1609
        %v2179 = vpack.c.bf16 %v1619, %v1615
        %v2180 = vpack.c.bf16 %v1621, %v1617
        %v2181 = vpack.c.bf16 %v1627, %v1623
        %v2182 = vpack.c.bf16 %v1629, %v1625
        %v2183 = vpack.c.bf16 %v1635, %v1631
        %v2184 = vpack.c.bf16 %v1637, %v1633
        %v2185 = vpack.c.bf16 %v1643, %v1639
        %v2186 = vpack.c.bf16 %v1645, %v1641
        %v2187 = vpack.c.bf16 %v1651, %v1647
        %v2188 = vpack.c.bf16 %v1653, %v1649
        %v2189 = vpack.c.bf16 %v1659, %v1655
        %v2190 = vpack.c.bf16 %v1661, %v1657
        %v2191 = vpack.c.bf16 %v1667, %v1663
        %v2192 = vpack.c.bf16 %v1669, %v1665
        %v2193 = vpack.c.bf16 %v1675, %v1671
        %v2194 = vpack.c.bf16 %v1677, %v1673
        %v2195 = vpack.c.bf16 %v1683, %v1679
        %v2196 = vpack.c.bf16 %v1685, %v1681
        %v2197 = vpack.c.bf16 %v1691, %v1687
        %v2198 = vpack.c.bf16 %v1693, %v1689
        %v2199 = vpack.c.bf16 %v1699, %v1695
        %v2200 = vpack.c.bf16 %v1701, %v1697
        %v2201 = vpack.c.bf16 %v1707, %v1703
        %v2202 = vpack.c.bf16 %v1709, %v1705
        %v2203 = vpack.c.bf16 %v1715, %v1711
        %v2204 = vpack.c.bf16 %v1717, %v1713
        %v2205 = vpack.c.bf16 %v1723, %v1719
        %v2206 = vpack.c.bf16 %v1725, %v1721
        %v2239 = vunpack.c.l.b16 %v636
        %v2240 = vunpack.c.l.b16 %v637
        %v2241 = vunpack.c.l.b16 %v638
        %v2242 = vunpack.c.l.b16 %v639
        %v2243 = vunpack.c.l.b16 %v640
        %v2244 = vunpack.c.l.b16 %v641
        %v2245 = vunpack.c.l.b16 %v642
        %v2246 = vunpack.c.l.b16 %v643
        %v2247 = vunpack.c.l.b16 %v644
        %v2248 = vunpack.c.l.b16 %v645
        %v2249 = vunpack.c.l.b16 %v646
        %v2250 = vunpack.c.l.b16 %v647
        %v2251 = vunpack.c.l.b16 %v648
        %v2252 = vunpack.c.l.b16 %v649
        %v2253 = vunpack.c.l.b16 %v650
        %v2254 = vunpack.c.l.b16 %v651
        %v2255 = vunpack.c.l.b16 %v652
        %v2256 = vunpack.c.l.b16 %v653
        %v2257 = vunpack.c.l.b16 %v654
        %v2258 = vunpack.c.l.b16 %v655
        %v2259 = vunpack.c.l.b16 %v656
        %v2260 = vunpack.c.l.b16 %v657
        %v2261 = vunpack.c.l.b16 %v658
        %v2262 = vunpack.c.l.b16 %v659
        %v2263 = vunpack.c.l.b16 %v660
        %v2264 = vunpack.c.l.b16 %v661
        %v2265 = vunpack.c.l.b16 %v662
        %v2266 = vunpack.c.l.b16 %v663
        %v2267 = vunpack.c.l.b16 %v664
        %v2268 = vunpack.c.l.b16 %v665
        %v2269 = vunpack.c.l.b16 %v666
        %v2270 = vunpack.c.l.b16 %v667
        %v2271 = vpack.c.b16 %v2240, %v2239
        %v2272 = vpack.c.b16 %v2242, %v2241
        %v2273 = vpack.c.b16 %v2244, %v2243
        %v2274 = vpack.c.b16 %v2246, %v2245
        %v2275 = vpack.c.b16 %v2248, %v2247
        %v2276 = vpack.c.b16 %v2250, %v2249
        %v2277 = vpack.c.b16 %v2252, %v2251
        %v2278 = vpack.c.b16 %v2254, %v2253
        %v2279 = vpack.c.b16 %v2256, %v2255
        %v2280 = vpack.c.b16 %v2258, %v2257
        %v2281 = vpack.c.b16 %v2260, %v2259
        %v2282 = vpack.c.b16 %v2262, %v2261
        %v2283 = vpack.c.b16 %v2264, %v2263
        %v2284 = vpack.c.b16 %v2266, %v2265
        %v2285 = vpack.c.b16 %v2268, %v2267
        %v2286 = vpack.c.b16 %v2270, %v2269
        %2303 = vmatprep.subr.bf16.mxu0 0
        %2304 = vmatpush1.bf16.msra.mxu0 %v2271
        %2305 = vmatprep.subr.bf16.mxu0 0
        %2306 = vmatpush1.bf16.msra.mxu0 %v2272
        %2307 = vmatprep.subr.bf16.mxu0 0
        %2308 = vmatpush1.bf16.msra.mxu0 %v2273
        %2309 = vmatprep.subr.bf16.mxu0 0
        %2310 = vmatpush1.bf16.msra.mxu0 %v2274
        %2311 = vmatprep.subr.bf16.mxu0 0
        %2312 = vmatpush1.bf16.msra.mxu0 %v2275
        %2313 = vmatprep.subr.bf16.mxu0 0
        %2314 = vmatpush1.bf16.msra.mxu0 %v2276
        %2315 = vmatprep.subr.bf16.mxu0 0
        %2316 = vmatpush1.bf16.msra.mxu0 %v2277
        %2317 = vmatprep.subr.bf16.mxu0 0
        %2318 = vmatpush1.bf16.msra.mxu0 %v2278
        %2319 = vmatprep.subr.bf16.mxu0 0
        %2320 = vmatpush1.bf16.msra.mxu0 %v2279
        %2321 = vmatprep.subr.bf16.mxu0 0
        %2322 = vmatpush1.bf16.msra.mxu0 %v2280
        %2323 = vmatprep.subr.bf16.mxu0 0
        %2324 = vmatpush1.bf16.msra.mxu0 %v2281
        %2325 = vmatprep.subr.bf16.mxu0 0
        %2326 = vmatpush1.bf16.msra.mxu0 %v2282
        %2327 = vmatprep.subr.bf16.mxu0 0
        %2328 = vmatpush1.bf16.msra.mxu0 %v2283
        %2329 = vmatprep.subr.bf16.mxu0 0
        %2330 = vmatpush1.bf16.msra.mxu0 %v2284
        %2331 = vmatprep.subr.bf16.mxu0 0
        %2332 = vmatpush1.bf16.msra.mxu0 %v2285
        %2333 = vmatprep.subr.bf16.mxu0 0
        %2334 = vmatpush1.bf16.msra.mxu0 %v2286
        %2335 = vmatprep.mubr.bf16.mxu0 %v2176
        %2336 = vmatmul.mubr.bf16.gmra.mrb[0].mxu0 %v2175
        %v2337 = vpop.f32.mrb[0].mxu0
        %v2338 = vadd.f32 0.0, %v2337
        %v2339 = vpop.f32.mrb[0].mxu0
        %v2340 = vpop.f32.mrb[0].mxu0
        %v2341 = vadd.f32 0.0, %v2340
        %v2342 = vpop.f32.mrb[0].mxu0
        %2343 = vmatprep.mubr.bf16.mxu0 %v2178
        %2344 = vmatmul.mubr.bf16.gmra.mrb[0].mxu0 %v2177
        %v2345 = vpop.f32.mrb[0].mxu0
        %v2346 = vadd.f32 0.0, %v2345
        %v2347 = vpop.f32.mrb[0].mxu0
        %v2348 = vpop.f32.mrb[0].mxu0
        %v2349 = vadd.f32 0.0, %v2348
        %v2350 = vpop.f32.mrb[0].mxu0
        %2351 = vmatprep.mubr.bf16.mxu0 %v2180
        %2352 = vmatmul.mubr.bf16.gmra.mrb[0].mxu0 %v2179
        %v2353 = vpop.f32.mrb[0].mxu0
        %v2354 = vadd.f32 0.0, %v2353
        %v2355 = vpop.f32.mrb[0].mxu0
        %v2356 = vpop.f32.mrb[0].mxu0
        %v2357 = vadd.f32 0.0, %v2356
        %v2358 = vpop.f32.mrb[0].mxu0
        %2359 = vmatprep.mubr.bf16.mxu0 %v2182
        %2360 = vmatmul.mubr.bf16.gmra.mrb[0].mxu0 %v2181
        %v2361 = vpop.f32.mrb[0].mxu0
        %v2362 = vadd.f32 0.0, %v2361
        %v2363 = vpop.f32.mrb[0].mxu0
        %v2364 = vpop.f32.mrb[0].mxu0
        %v2365 = vadd.f32 0.0, %v2364
        %v2366 = vpop.f32.mrb[0].mxu0
        %2367 = vmatprep.mubr.bf16.mxu0 %v2184
        %2368 = vmatmul.mubr.bf16.gmra.mrb[0].mxu0 %v2183
        %v2369 = vpop.f32.mrb[0].mxu0
        %v2370 = vadd.f32 0.0, %v2369
        %v2371 = vpop.f32.mrb[0].mxu0
        %v2372 = vpop.f32.mrb[0].mxu0
        %v2373 = vadd.f32 0.0, %v2372
        %v2374 = vpop.f32.mrb[0].mxu0
        %2375 = vmatprep.mubr.bf16.mxu0 %v2186
        %2376 = vmatmul.mubr.bf16.gmra.mrb[0].mxu0 %v2185
        %v2377 = vpop.f32.mrb[0].mxu0
        %v2378 = vadd.f32 0.0, %v2377
        %v2379 = vpop.f32.mrb[0].mxu0
        %v2380 = vpop.f32.mrb[0].mxu0
        %v2381 = vadd.f32 0.0, %v2380
        %v2382 = vpop.f32.mrb[0].mxu0
        %2383 = vmatprep.mubr.bf16.mxu0 %v2188
        %2384 = vmatmul.mubr.bf16.gmra.mrb[0].mxu0 %v2187
        %v2385 = vpop.f32.mrb[0].mxu0
        %v2386 = vadd.f32 0.0, %v2385
        %v2387 = vpop.f32.mrb[0].mxu0
        %v2388 = vpop.f32.mrb[0].mxu0
        %v2389 = vadd.f32 0.0, %v2388
        %v2390 = vpop.f32.mrb[0].mxu0
        %2391 = vmatprep.mubr.bf16.mxu0 %v2190
        %2392 = vmatmul.mubr.bf16.gmra.mrb[0].mxu0 %v2189
        %v2393 = vpop.f32.mrb[0].mxu0
        %v2394 = vadd.f32 0.0, %v2393
        %v2395 = vpop.f32.mrb[0].mxu0
        %v2396 = vpop.f32.mrb[0].mxu0
        %v2397 = vadd.f32 0.0, %v2396
        %v2398 = vpop.f32.mrb[0].mxu0
        %2399 = vmatprep.mubr.bf16.mxu0 %v2192
        %2400 = vmatmul.mubr.bf16.gmra.mrb[0].mxu0 %v2191
        %v2401 = vpop.f32.mrb[0].mxu0
        %v2402 = vadd.f32 0.0, %v2401
        %v2403 = vpop.f32.mrb[0].mxu0
        %v2404 = vpop.f32.mrb[0].mxu0
        %v2405 = vadd.f32 0.0, %v2404
        %v2406 = vpop.f32.mrb[0].mxu0
        %2407 = vmatprep.mubr.bf16.mxu0 %v2194
        %2408 = vmatmul.mubr.bf16.gmra.mrb[0].mxu0 %v2193
        %v2409 = vpop.f32.mrb[0].mxu0
        %v2410 = vadd.f32 0.0, %v2409
        %v2411 = vpop.f32.mrb[0].mxu0
        %v2412 = vpop.f32.mrb[0].mxu0
        %v2413 = vadd.f32 0.0, %v2412
        %v2414 = vpop.f32.mrb[0].mxu0
        %2415 = vmatprep.mubr.bf16.mxu0 %v2196
        %2416 = vmatmul.mubr.bf16.gmra.mrb[0].mxu0 %v2195
        %v2417 = vpop.f32.mrb[0].mxu0
        %v2418 = vadd.f32 0.0, %v2417
        %v2419 = vpop.f32.mrb[0].mxu0
        %v2420 = vpop.f32.mrb[0].mxu0
        %v2421 = vadd.f32 0.0, %v2420
        %v2422 = vpop.f32.mrb[0].mxu0
        %2423 = vmatprep.mubr.bf16.mxu0 %v2198
        %2424 = vmatmul.mubr.bf16.gmra.mrb[0].mxu0 %v2197
        %v2425 = vpop.f32.mrb[0].mxu0
        %v2426 = vadd.f32 0.0, %v2425
        %v2427 = vpop.f32.mrb[0].mxu0
        %v2428 = vpop.f32.mrb[0].mxu0
        %v2429 = vadd.f32 0.0, %v2428
        %v2430 = vpop.f32.mrb[0].mxu0
        %2431 = vmatprep.mubr.bf16.mxu0 %v2200
        %2432 = vmatmul.mubr.bf16.gmra.mrb[0].mxu0 %v2199
        %v2433 = vpop.f32.mrb[0].mxu0
        %v2434 = vadd.f32 0.0, %v2433
        %v2435 = vpop.f32.mrb[0].mxu0
        %v2436 = vpop.f32.mrb[0].mxu0
        %v2437 = vadd.f32 0.0, %v2436
        %v2438 = vpop.f32.mrb[0].mxu0
        %2439 = vmatprep.mubr.bf16.mxu0 %v2202
        %2440 = vmatmul.mubr.bf16.gmra.mrb[0].mxu0 %v2201
        %v2441 = vpop.f32.mrb[0].mxu0
        %v2442 = vadd.f32 0.0, %v2441
        %v2443 = vpop.f32.mrb[0].mxu0
        %v2444 = vpop.f32.mrb[0].mxu0
        %v2445 = vadd.f32 0.0, %v2444
        %v2446 = vpop.f32.mrb[0].mxu0
        %2447 = vmatprep.mubr.bf16.mxu0 %v2204
        %2448 = vmatmul.mubr.bf16.gmra.mrb[0].mxu0 %v2203
        %v2449 = vpop.f32.mrb[0].mxu0
        %v2450 = vadd.f32 0.0, %v2449
        %v2451 = vpop.f32.mrb[0].mxu0
        %v2452 = vpop.f32.mrb[0].mxu0
        %v2453 = vadd.f32 0.0, %v2452
        %v2454 = vpop.f32.mrb[0].mxu0
        %2455 = vmatprep.mubr.bf16.mxu0 %v2206
        %2456 = vmatmul.mubr.bf16.gmra.mrb[0].mxu0 %v2205
        %v2457 = vpop.f32.mrb[0].mxu0
        %v2458 = vadd.f32 0.0, %v2457
        %v2459 = vpop.f32.mrb[0].mxu0
        %v2460 = vpop.f32.mrb[0].mxu0
        %v2461 = vadd.f32 0.0, %v2460
        %v2462 = vpop.f32.mrb[0].mxu0
        %2463 = vdwg.mxu0
        %v2464 = vadd.f32 %v2143, %v2338
        %v2465 = vadd.f32 %v2144, %v2341
        %v2466 = vadd.f32 %v2145, %v2346
        %v2467 = vadd.f32 %v2146, %v2349
        %v2468 = vadd.f32 %v2147, %v2354
        %v2469 = vadd.f32 %v2148, %v2357
        %v2470 = vadd.f32 %v2149, %v2362
        %v2471 = vadd.f32 %v2150, %v2365
        %v2472 = vadd.f32 %v2151, %v2370
        %v2473 = vadd.f32 %v2152, %v2373
        %v2474 = vadd.f32 %v2153, %v2378
        %v2475 = vadd.f32 %v2154, %v2381
        %v2476 = vadd.f32 %v2155, %v2386
        %v2477 = vadd.f32 %v2156, %v2389
        %v2478 = vadd.f32 %v2157, %v2394
        %v2479 = vadd.f32 %v2158, %v2397
        %v2480 = vadd.f32 %v2159, %v2402
        %v2481 = vadd.f32 %v2160, %v2405
        %v2482 = vadd.f32 %v2161, %v2410
        %v2483 = vadd.f32 %v2162, %v2413
        %v2484 = vadd.f32 %v2163, %v2418
        %v2485 = vadd.f32 %v2164, %v2421
        %v2486 = vadd.f32 %v2165, %v2426
        %v2487 = vadd.f32 %v2166, %v2429
        %v2488 = vadd.f32 %v2167, %v2434
        %v2489 = vadd.f32 %v2168, %v2437
        %v2490 = vadd.f32 %v2169, %v2442
        %v2491 = vadd.f32 %v2170, %v2445
        %v2492 = vadd.f32 %v2171, %v2450
        %v2493 = vadd.f32 %v2172, %v2453
        %v2494 = vadd.f32 %v2173, %v2458
        %v2495 = vadd.f32 %v2174, %v2461
        %2496 = vst.msk [vmem:[#allocation4] sm:$0xff] %vm828, %v2464
        %2497 = vst.msk [vmem:[#allocation4 + $0x8] sm:$0xff] %vm828, %v2465
        %2498 = vst.msk [vmem:[#allocation4 + $0x10] sm:$0xff] %vm828, %v2466
        %2499 = vst.msk [vmem:[#allocation4 + $0x18] sm:$0xff] %vm828, %v2467
        %2500 = vst.msk [vmem:[#allocation4 + $0x20] sm:$0xff] %vm828, %v2468
        %2501 = vst.msk [vmem:[#allocation4 + $0x28] sm:$0xff] %vm828, %v2469
        %2502 = vst.msk [vmem:[#allocation4 + $0x30] sm:$0xff] %vm828, %v2470
        %2503 = vst.msk [vmem:[#allocation4 + $0x38] sm:$0xff] %vm828, %v2471
        %2504 = vst.msk [vmem:[#allocation4 + $0x40] sm:$0xff] %vm828, %v2472
        %2505 = vst.msk [vmem:[#allocation4 + $0x48] sm:$0xff] %vm828, %v2473
        %2506 = vst.msk [vmem:[#allocation4 + $0x50] sm:$0xff] %vm828, %v2474
        %2507 = vst.msk [vmem:[#allocation4 + $0x58] sm:$0xff] %vm828, %v2475
        %2508 = vst.msk [vmem:[#allocation4 + $0x60] sm:$0xff] %vm828, %v2476
        %2509 = vst.msk [vmem:[#allocation4 + $0x68] sm:$0xff] %vm828, %v2477
        %2510 = vst.msk [vmem:[#allocation4 + $0x70] sm:$0xff] %vm828, %v2478
        %2511 = vst.msk [vmem:[#allocation4 + $0x78] sm:$0xff] %vm828, %v2479
        %2512 = vst.msk [vmem:[#allocation4 + $0x80] sm:$0xff] %vm828, %v2480
        %2513 = vst.msk [vmem:[#allocation4 + $0x88] sm:$0xff] %vm828, %v2481
        %2514 = vst.msk [vmem:[#allocation4 + $0x90] sm:$0xff] %vm828, %v2482
        %2515 = vst.msk [vmem:[#allocation4 + $0x98] sm:$0xff] %vm828, %v2483
        %2516 = vst.msk [vmem:[#allocation4 + $0xa0] sm:$0xff] %vm828, %v2484
        %2517 = vst.msk [vmem:[#allocation4 + $0xa8] sm:$0xff] %vm828, %v2485
        %2518 = vst.msk [vmem:[#allocation4 + $0xb0] sm:$0xff] %vm828, %v2486
        %2519 = vst.msk [vmem:[#allocation4 + $0xb8] sm:$0xff] %vm828, %v2487
        %2520 = vst.msk [vmem:[#allocation4 + $0xc0] sm:$0xff] %vm828, %v2488
        %2521 = vst.msk [vmem:[#allocation4 + $0xc8] sm:$0xff] %vm828, %v2489
        %2522 = vst.msk [vmem:[#allocation4 + $0xd0] sm:$0xff] %vm828, %v2490
        %2523 = vst.msk [vmem:[#allocation4 + $0xd8] sm:$0xff] %vm828, %v2491
        %2524 = vst.msk [vmem:[#allocation4 + $0xe0] sm:$0xff] %vm828, %v2492
        %2525 = vst.msk [vmem:[#allocation4 + $0xe8] sm:$0xff] %vm828, %v2493
        %2526 = vst.msk [vmem:[#allocation4 + $0xf0] sm:$0xff] %vm828, %v2494
        %2527 = vst.msk [vmem:[#allocation4 + $0xf8] sm:$0xff] %vm828, %v2495
        %2528 = vst.msk [vmem:[#allocation2] sm:$0xff] %vm1918, %v1246
        %2529 = vst.msk [vmem:[#allocation2 + $0x8] sm:$0xff] %vm1918, %v1247
        %2530 = vst.msk [vmem:[#allocation2 + $0x10] sm:$0xff] %vm1918, %v1248
        %2531 = vst.msk [vmem:[#allocation2 + $0x18] sm:$0xff] %vm1918, %v1249
        %2532 = vst.msk [vmem:[#allocation2 + $0x20] sm:$0xff] %vm1918, %v1250
        %2533 = vst.msk [vmem:[#allocation2 + $0x28] sm:$0xff] %vm1918, %v1251
        %2534 = vst.msk [vmem:[#allocation2 + $0x30] sm:$0xff] %vm1918, %v1252
        %2535 = vst.msk [vmem:[#allocation2 + $0x38] sm:$0xff] %vm1918, %v1253
        %2536 = vst.msk [vmem:[#allocation2 + $0x40] sm:$0xff] %vm1918, %v1254
        %2537 = vst.msk [vmem:[#allocation2 + $0x48] sm:$0xff] %vm1918, %v1255
        %2538 = vst.msk [vmem:[#allocation2 + $0x50] sm:$0xff] %vm1918, %v1256
        %2539 = vst.msk [vmem:[#allocation2 + $0x58] sm:$0xff] %vm1918, %v1257
        %2540 = vst.msk [vmem:[#allocation2 + $0x60] sm:$0xff] %vm1918, %v1258
        %2541 = vst.msk [vmem:[#allocation2 + $0x68] sm:$0xff] %vm1918, %v1259
        %2542 = vst.msk [vmem:[#allocation2 + $0x70] sm:$0xff] %vm1918, %v1260
        %2543 = vst.msk [vmem:[#allocation2 + $0x78] sm:$0xff] %vm1918, %v1261
        %2544 = vst.msk [vmem:[#allocation2 + $0x80] sm:$0xff] %vm1918, %v1262
        %2545 = vst.msk [vmem:[#allocation2 + $0x88] sm:$0xff] %vm1918, %v1263
        %2546 = vst.msk [vmem:[#allocation2 + $0x90] sm:$0xff] %vm1918, %v1264
        %2547 = vst.msk [vmem:[#allocation2 + $0x98] sm:$0xff] %vm1918, %v1265
        %2548 = vst.msk [vmem:[#allocation2 + $0xa0] sm:$0xff] %vm1918, %v1266
        %2549 = vst.msk [vmem:[#allocation2 + $0xa8] sm:$0xff] %vm1918, %v1267
        %2550 = vst.msk [vmem:[#allocation2 + $0xb0] sm:$0xff] %vm1918, %v1268
        %2551 = vst.msk [vmem:[#allocation2 + $0xb8] sm:$0xff] %vm1918, %v1269
        %2552 = vst.msk [vmem:[#allocation2 + $0xc0] sm:$0xff] %vm1918, %v1270
        %2553 = vst.msk [vmem:[#allocation2 + $0xc8] sm:$0xff] %vm1918, %v1271
        %2554 = vst.msk [vmem:[#allocation2 + $0xd0] sm:$0xff] %vm1918, %v1272
        %2555 = vst.msk [vmem:[#allocation2 + $0xd8] sm:$0xff] %vm1918, %v1273
        %2556 = vst.msk [vmem:[#allocation2 + $0xe0] sm:$0xff] %vm1918, %v1274
        %2557 = vst.msk [vmem:[#allocation2 + $0xe8] sm:$0xff] %vm1918, %v1275
        %2558 = vst.msk [vmem:[#allocation2 + $0xf0] sm:$0xff] %vm1918, %v1276
        %2559 = vst.msk [vmem:[#allocation2 + $0xf8] sm:$0xff] %vm1918, %v1277
        // Predicated region
        $region53: #{tpu_custom_call.1} parent=43 // pred_check
          %p2560 = pneg %p464
        $region54: #{tpu_custom_call.1} parent=43 // pred_check_branch
          %2562 = sbr.rel (%p2560) target = $region56
        $region55: #{tpu_custom_call.1} parent=43 // pred_region
          %v2563 = vld [vmem:[#allocation4] sm:$0xff]
          %v2564 = vld [vmem:[#allocation4 + $0x8] sm:$0xff]
          %v2565 = vld [vmem:[#allocation4 + $0x10] sm:$0xff]
          %v2566 = vld [vmem:[#allocation4 + $0x18] sm:$0xff]
          %v2567 = vld [vmem:[#allocation4 + $0x20] sm:$0xff]
          %v2568 = vld [vmem:[#allocation4 + $0x28] sm:$0xff]
          %v2569 = vld [vmem:[#allocation4 + $0x30] sm:$0xff]
          %v2570 = vld [vmem:[#allocation4 + $0x38] sm:$0xff]
          %v2571 = vld [vmem:[#allocation4 + $0x40] sm:$0xff]
          %v2572 = vld [vmem:[#allocation4 + $0x48] sm:$0xff]
          %v2573 = vld [vmem:[#allocation4 + $0x50] sm:$0xff]
          %v2574 = vld [vmem:[#allocation4 + $0x58] sm:$0xff]
          %v2575 = vld [vmem:[#allocation4 + $0x60] sm:$0xff]
          %v2576 = vld [vmem:[#allocation4 + $0x68] sm:$0xff]
          %v2577 = vld [vmem:[#allocation4 + $0x70] sm:$0xff]
          %v2578 = vld [vmem:[#allocation4 + $0x78] sm:$0xff]
          %v2579 = vld [vmem:[#allocation4 + $0x80] sm:$0xff]
          %v2580 = vld [vmem:[#allocation4 + $0x88] sm:$0xff]
          %v2581 = vld [vmem:[#allocation4 + $0x90] sm:$0xff]
          %v2582 = vld [vmem:[#allocation4 + $0x98] sm:$0xff]
          %v2583 = vld [vmem:[#allocation4 + $0xa0] sm:$0xff]
          %v2584 = vld [vmem:[#allocation4 + $0xa8] sm:$0xff]
          %v2585 = vld [vmem:[#allocation4 + $0xb0] sm:$0xff]
          %v2586 = vld [vmem:[#allocation4 + $0xb8] sm:$0xff]
          %v2587 = vld [vmem:[#allocation4 + $0xc0] sm:$0xff]
          %v2588 = vld [vmem:[#allocation4 + $0xc8] sm:$0xff]
          %v2589 = vld [vmem:[#allocation4 + $0xd0] sm:$0xff]
          %v2590 = vld [vmem:[#allocation4 + $0xd8] sm:$0xff]
          %v2591 = vld [vmem:[#allocation4 + $0xe0] sm:$0xff]
          %v2592 = vld [vmem:[#allocation4 + $0xe8] sm:$0xff]
          %v2593 = vld [vmem:[#allocation4 + $0xf0] sm:$0xff]
          %v2594 = vld [vmem:[#allocation4 + $0xf8] sm:$0xff]
          %v2595 = vld [vmem:[#allocation3] sm:$0xff]
          %v2596 = vld [vmem:[#allocation3 + $0x8] sm:$0xff]
          %v2597 = vld [vmem:[#allocation3 + $0x10] sm:$0xff]
          %v2598 = vld [vmem:[#allocation3 + $0x18] sm:$0xff]
          %v2599 = vld [vmem:[#allocation3 + $0x20] sm:$0xff]
          %v2600 = vld [vmem:[#allocation3 + $0x28] sm:$0xff]
          %v2601 = vld [vmem:[#allocation3 + $0x30] sm:$0xff]
          %v2602 = vld [vmem:[#allocation3 + $0x38] sm:$0xff]
          %v2603 = vld [vmem:[#allocation3 + $0x40] sm:$0xff]
          %v2604 = vld [vmem:[#allocation3 + $0x48] sm:$0xff]
          %v2605 = vld [vmem:[#allocation3 + $0x50] sm:$0xff]
          %v2606 = vld [vmem:[#allocation3 + $0x58] sm:$0xff]
          %v2607 = vld [vmem:[#allocation3 + $0x60] sm:$0xff]
          %v2608 = vld [vmem:[#allocation3 + $0x68] sm:$0xff]
          %v2609 = vld [vmem:[#allocation3 + $0x70] sm:$0xff]
          %v2610 = vld [vmem:[#allocation3 + $0x78] sm:$0xff]
          %v2611 = vld [vmem:[#allocation3 + $0x80] sm:$0xff]
          %v2612 = vld [vmem:[#allocation3 + $0x88] sm:$0xff]
          %v2613 = vld [vmem:[#allocation3 + $0x90] sm:$0xff]
          %v2614 = vld [vmem:[#allocation3 + $0x98] sm:$0xff]
          %v2615 = vld [vmem:[#allocation3 + $0xa0] sm:$0xff]
          %v2616 = vld [vmem:[#allocation3 + $0xa8] sm:$0xff]
          %v2617 = vld [vmem:[#allocation3 + $0xb0] sm:$0xff]
          %v2618 = vld [vmem:[#allocation3 + $0xb8] sm:$0xff]
          %v2619 = vld [vmem:[#allocation3 + $0xc0] sm:$0xff]
          %v2620 = vld [vmem:[#allocation3 + $0xc8] sm:$0xff]
          %v2621 = vld [vmem:[#allocation3 + $0xd0] sm:$0xff]
          %v2622 = vld [vmem:[#allocation3 + $0xd8] sm:$0xff]
          %v2623 = vld [vmem:[#allocation3 + $0xe0] sm:$0xff]
          %v2624 = vld [vmem:[#allocation3 + $0xe8] sm:$0xff]
          %v2625 = vld [vmem:[#allocation3 + $0xf0] sm:$0xff]
          %v2626 = vld [vmem:[#allocation3 + $0xf8] sm:$0xff]
          %2628 = vset.pattern.permute.xlu0 0
          %2629 = vperm.xlu0 %2628, %v2595
          %v2630 = vpop.permute.xlu0 %2629
          %2633 = vset.pattern.permute.xlu0 0
          %2634 = vperm.xlu0 %2633, %v2596
          %v2635 = vpop.permute.xlu0 %2634
          %2638 = vset.pattern.permute.xlu0 0
          %2639 = vperm.xlu0 %2638, %v2597
          %v2640 = vpop.permute.xlu0 %2639
          %2643 = vset.pattern.permute.xlu0 0
          %2644 = vperm.xlu0 %2643, %v2598
          %v2645 = vpop.permute.xlu0 %2644
          %2648 = vset.pattern.permute.xlu0 0
          %2649 = vperm.xlu0 %2648, %v2599
          %v2650 = vpop.permute.xlu0 %2649
          %2653 = vset.pattern.permute.xlu0 0
          %2654 = vperm.xlu0 %2653, %v2600
          %v2655 = vpop.permute.xlu0 %2654
          %2658 = vset.pattern.permute.xlu0 0
          %2659 = vperm.xlu0 %2658, %v2601
          %v2660 = vpop.permute.xlu0 %2659
          %2663 = vset.pattern.permute.xlu0 0
          %2664 = vperm.xlu0 %2663, %v2602
          %v2665 = vpop.permute.xlu0 %2664
          %2668 = vset.pattern.permute.xlu0 0
          %2669 = vperm.xlu0 %2668, %v2603
          %v2670 = vpop.permute.xlu0 %2669
          %2673 = vset.pattern.permute.xlu0 0
          %2674 = vperm.xlu0 %2673, %v2604
          %v2675 = vpop.permute.xlu0 %2674
          %2678 = vset.pattern.permute.xlu0 0
          %2679 = vperm.xlu0 %2678, %v2605
          %v2680 = vpop.permute.xlu0 %2679
          %2683 = vset.pattern.permute.xlu0 0
          %2684 = vperm.xlu0 %2683, %v2606
          %v2685 = vpop.permute.xlu0 %2684
          %2688 = vset.pattern.permute.xlu0 0
          %2689 = vperm.xlu0 %2688, %v2607
          %v2690 = vpop.permute.xlu0 %2689
          %2693 = vset.pattern.permute.xlu0 0
          %2694 = vperm.xlu0 %2693, %v2608
          %v2695 = vpop.permute.xlu0 %2694
          %2698 = vset.pattern.permute.xlu0 0
          %2699 = vperm.xlu0 %2698, %v2609
          %v2700 = vpop.permute.xlu0 %2699
          %2703 = vset.pattern.permute.xlu0 0
          %2704 = vperm.xlu0 %2703, %v2610
          %v2705 = vpop.permute.xlu0 %2704
          %2708 = vset.pattern.permute.xlu0 0
          %2709 = vperm.xlu0 %2708, %v2611
          %v2710 = vpop.permute.xlu0 %2709
          %2713 = vset.pattern.permute.xlu0 0
          %2714 = vperm.xlu0 %2713, %v2612
          %v2715 = vpop.permute.xlu0 %2714
          %2718 = vset.pattern.permute.xlu0 0
          %2719 = vperm.xlu0 %2718, %v2613
          %v2720 = vpop.permute.xlu0 %2719
          %2723 = vset.pattern.permute.xlu0 0
          %2724 = vperm.xlu0 %2723, %v2614
          %v2725 = vpop.permute.xlu0 %2724
          %2728 = vset.pattern.permute.xlu0 0
          %2729 = vperm.xlu0 %2728, %v2615
          %v2730 = vpop.permute.xlu0 %2729
          %2733 = vset.pattern.permute.xlu0 0
          %2734 = vperm.xlu0 %2733, %v2616
          %v2735 = vpop.permute.xlu0 %2734
          %2738 = vset.pattern.permute.xlu0 0
          %2739 = vperm.xlu0 %2738, %v2617
          %v2740 = vpop.permute.xlu0 %2739
          %2743 = vset.pattern.permute.xlu0 0
          %2744 = vperm.xlu0 %2743, %v2618
          %v2745 = vpop.permute.xlu0 %2744
          %2748 = vset.pattern.permute.xlu0 0
          %2749 = vperm.xlu0 %2748, %v2619
          %v2750 = vpop.permute.xlu0 %2749
          %2753 = vset.pattern.permute.xlu0 0
          %2754 = vperm.xlu0 %2753, %v2620
          %v2755 = vpop.permute.xlu0 %2754
          %2758 = vset.pattern.permute.xlu0 0
          %2759 = vperm.xlu0 %2758, %v2621
          %v2760 = vpop.permute.xlu0 %2759
          %2763 = vset.pattern.permute.xlu0 0
          %2764 = vperm.xlu0 %2763, %v2622
          %v2765 = vpop.permute.xlu0 %2764
          %2768 = vset.pattern.permute.xlu0 0
          %2769 = vperm.xlu0 %2768, %v2623
          %v2770 = vpop.permute.xlu0 %2769
          %2773 = vset.pattern.permute.xlu0 0
          %2774 = vperm.xlu0 %2773, %v2624
          %v2775 = vpop.permute.xlu0 %2774
          %2778 = vset.pattern.permute.xlu0 0
          %2779 = vperm.xlu0 %2778, %v2625
          %v2780 = vpop.permute.xlu0 %2779
          %2783 = vset.pattern.permute.xlu0 0
          %2784 = vperm.xlu0 %2783, %v2626
          %v2785 = vpop.permute.xlu0 %2784
          %v2787 = vrcp.pop %v2630
          %v2788 = vmul.f32 %v2563, %v2787
          %v2789 = vrcp.pop %v2635
          %v2790 = vmul.f32 %v2564, %v2789
          %v2791 = vrcp.pop %v2640
          %v2792 = vmul.f32 %v2565, %v2791
          %v2793 = vrcp.pop %v2645
          %v2794 = vmul.f32 %v2566, %v2793
          %v2795 = vrcp.pop %v2650
          %v2796 = vmul.f32 %v2567, %v2795
          %v2797 = vrcp.pop %v2655
          %v2798 = vmul.f32 %v2568, %v2797
          %v2799 = vrcp.pop %v2660
          %v2800 = vmul.f32 %v2569, %v2799
          %v2801 = vrcp.pop %v2665
          %v2802 = vmul.f32 %v2570, %v2801
          %v2803 = vrcp.pop %v2670
          %v2804 = vmul.f32 %v2571, %v2803
          %v2805 = vrcp.pop %v2675
          %v2806 = vmul.f32 %v2572, %v2805
          %v2807 = vrcp.pop %v2680
          %v2808 = vmul.f32 %v2573, %v2807
          %v2809 = vrcp.pop %v2685
          %v2810 = vmul.f32 %v2574, %v2809
          %v2811 = vrcp.pop %v2690
          %v2812 = vmul.f32 %v2575, %v2811
          %v2813 = vrcp.pop %v2695
          %v2814 = vmul.f32 %v2576, %v2813
          %v2815 = vrcp.pop %v2700
          %v2816 = vmul.f32 %v2577, %v2815
          %v2817 = vrcp.pop %v2705
          %v2818 = vmul.f32 %v2578, %v2817
          %v2819 = vrcp.pop %v2710
          %v2820 = vmul.f32 %v2579, %v2819
          %v2821 = vrcp.pop %v2715
          %v2822 = vmul.f32 %v2580, %v2821
          %v2823 = vrcp.pop %v2720
          %v2824 = vmul.f32 %v2581, %v2823
          %v2825 = vrcp.pop %v2725
          %v2826 = vmul.f32 %v2582, %v2825
          %v2827 = vrcp.pop %v2730
          %v2828 = vmul.f32 %v2583, %v2827
          %v2829 = vrcp.pop %v2735
          %v2830 = vmul.f32 %v2584, %v2829
          %v2831 = vrcp.pop %v2740
          %v2832 = vmul.f32 %v2585, %v2831
          %v2833 = vrcp.pop %v2745
          %v2834 = vmul.f32 %v2586, %v2833
          %v2835 = vrcp.pop %v2750
          %v2836 = vmul.f32 %v2587, %v2835
          %v2837 = vrcp.pop %v2755
          %v2838 = vmul.f32 %v2588, %v2837
          %v2839 = vrcp.pop %v2760
          %v2840 = vmul.f32 %v2589, %v2839
          %v2841 = vrcp.pop %v2765
          %v2842 = vmul.f32 %v2590, %v2841
          %v2843 = vrcp.pop %v2770
          %v2844 = vmul.f32 %v2591, %v2843
          %v2845 = vrcp.pop %v2775
          %v2846 = vmul.f32 %v2592, %v2845
          %v2847 = vrcp.pop %v2780
          %v2848 = vmul.f32 %v2593, %v2847
          %v2849 = vrcp.pop %v2785
          %v2850 = vmul.f32 %v2594, %v2849
          %v2851 = vld [vmem:[%s450] sm:$0xff]
          %v2853 = vsel %vm828, %v2851, 0
          %v2856 = vsel %vm828, %v2788, 0
          %v2859 = vsel %vm828, %v2790, 0
          %v2862 = vsel %vm828, %v2792, 0
          %v2865 = vsel %vm828, %v2794, 0
          %v2868 = vsel %vm828, %v2796, 0
          %v2871 = vsel %vm828, %v2798, 0
          %v2874 = vsel %vm828, %v2800, 0
          %v2877 = vsel %vm828, %v2802, 0
          %v2880 = vsel %vm828, %v2804, 0
          %v2883 = vsel %vm828, %v2806, 0
          %v2886 = vsel %vm828, %v2808, 0
          %v2889 = vsel %vm828, %v2810, 0
          %v2892 = vsel %vm828, %v2812, 0
          %v2895 = vsel %vm828, %v2814, 0
          %v2898 = vsel %vm828, %v2816, 0
          %v2901 = vsel %vm828, %v2818, 0
          %v2904 = vsel %vm828, %v2820, 0
          %v2907 = vsel %vm828, %v2822, 0
          %v2910 = vsel %vm828, %v2824, 0
          %v2913 = vsel %vm828, %v2826, 0
          %v2916 = vsel %vm828, %v2828, 0
          %v2919 = vsel %vm828, %v2830, 0
          %v2922 = vsel %vm828, %v2832, 0
          %v2925 = vsel %vm828, %v2834, 0
          %v2928 = vsel %vm828, %v2836, 0
          %v2931 = vsel %vm828, %v2838, 0
          %v2934 = vsel %vm828, %v2840, 0
          %v2937 = vsel %vm828, %v2842, 0
          %v2940 = vsel %vm828, %v2844, 0
          %v2943 = vsel %vm828, %v2846, 0
          %v2946 = vsel %vm828, %v2848, 0
          %v2949 = vsel %vm828, %v2850, 0
          %2951 = vmatprep.subr.mxu0 0.0
          %2952 = vmatpush1.xpose.msra.mxu0 %v2856
          %2953 = vmatprep.subr.mxu0 0.0
          %2954 = vmatpush1.xpose.msra.mxu0 %v2859
          %2955 = vmatprep.subr.mxu0 0.0
          %2956 = vmatpush1.xpose.msra.mxu0 %v2862
          %2957 = vmatprep.subr.mxu0 0.0
          %2958 = vmatpush1.xpose.msra.mxu0 %v2865
          %2959 = vmatprep.subr.mxu0 0.0
          %2960 = vmatpush1.xpose.msra.mxu0 %v2868
          %2961 = vmatprep.subr.mxu0 0.0
          %2962 = vmatpush1.xpose.msra.mxu0 %v2871
          %2963 = vmatprep.subr.mxu0 0.0
          %2964 = vmatpush1.xpose.msra.mxu0 %v2874
          %2965 = vmatprep.subr.mxu0 0.0
          %2966 = vmatpush1.xpose.msra.mxu0 %v2877
          %2967 = vmatprep.subr.mxu0 0.0
          %2968 = vmatpush1.xpose.msra.mxu0 %v2880
          %2969 = vmatprep.subr.mxu0 0.0
          %2970 = vmatpush1.xpose.msra.mxu0 %v2883
          %2971 = vmatprep.subr.mxu0 0.0
          %2972 = vmatpush1.xpose.msra.mxu0 %v2886
          %2973 = vmatprep.subr.mxu0 0.0
          %2974 = vmatpush1.xpose.msra.mxu0 %v2889
          %2975 = vmatprep.subr.mxu0 0.0
          %2976 = vmatpush1.xpose.msra.mxu0 %v2892
          %2977 = vmatprep.subr.mxu0 0.0
          %2978 = vmatpush1.xpose.msra.mxu0 %v2895
          %2979 = vmatprep.subr.mxu0 0.0
          %2980 = vmatpush1.xpose.msra.mxu0 %v2898
          %2981 = vmatprep.subr.mxu0 0.0
          %2982 = vmatpush1.xpose.msra.mxu0 %v2901
          %2983 = vmatprep.subr.mxu0 0.0
          %2984 = vmatpush1.xpose.msra.mxu0 %v2904
          %2985 = vmatprep.subr.mxu0 0.0
          %2986 = vmatpush1.xpose.msra.mxu0 %v2907
          %2987 = vmatprep.subr.mxu0 0.0
          %2988 = vmatpush1.xpose.msra.mxu0 %v2910
          %2989 = vmatprep.subr.mxu0 0.0
          %2990 = vmatpush1.xpose.msra.mxu0 %v2913
          %2991 = vmatprep.subr.mxu0 0.0
          %2992 = vmatpush1.xpose.msra.mxu0 %v2916
          %2993 = vmatprep.subr.mxu0 0.0
          %2994 = vmatpush1.xpose.msra.mxu0 %v2919
          %2995 = vmatprep.subr.mxu0 0.0
          %2996 = vmatpush1.xpose.msra.mxu0 %v2922
          %2997 = vmatprep.subr.mxu0 0.0
          %2998 = vmatpush1.xpose.msra.mxu0 %v2925
          %2999 = vmatprep.subr.mxu0 0.0
          %3000 = vmatpush1.xpose.msra.mxu0 %v2928
          %3001 = vmatprep.subr.mxu0 0.0
          %3002 = vmatpush1.xpose.msra.mxu0 %v2931
          %3003 = vmatprep.subr.mxu0 0.0
          %3004 = vmatpush1.xpose.msra.mxu0 %v2934
          %3005 = vmatprep.subr.mxu0 0.0
          %3006 = vmatpush1.xpose.msra.mxu0 %v2937
          %3007 = vmatprep.subr.mxu0 0.0
          %3008 = vmatpush1.xpose.msra.mxu0 %v2940
          %3009 = vmatprep.subr.mxu0 0.0
          %3010 = vmatpush1.xpose.msra.mxu0 %v2943
          %3011 = vmatprep.subr.mxu0 0.0
          %3012 = vmatpush1.xpose.msra.mxu0 %v2946
          %3013 = vmatprep.subr.mxu0 0.0
          %3014 = vmatpush1.xpose.msra.mxu0 %v2949
          %3015 = vmatprep.mubr.f32.mxu0 0.0
          %3016 = vmatmul.mubr.f32.gmra.mrb[0].mxu0 %v2853
          %v3017 = vpop.f32.mrb[0].mxu0
          %v3018 = vadd.f32 0.0, %v3017
          %v3019 = vpop.f32.mrb[0].mxu0
          %v3020 = vadd.f32 0.0, %v3019
          %3021 = vdwg.mxu0
          %v3022 = vld [vmem:[#allocation5] sm:$0xff]
          %v3023 = vld [vmem:[#allocation5 + $0x8] sm:$0xff]
          %v3024 = vadd.f32 %v3022, %v3018
          %v3025 = vadd.f32 %v3023, %v3020
          %3026 = vst [vmem:[#allocation5] sm:$0xff] %v3024
          %3027 = vst [vmem:[#allocation5 + $0x8] sm:$0xff] %v3025
          %p3028 = scmp.eq.s32.totalorder %s28, 3
          // Predicated region
          $region57: #{tpu_custom_call.1} parent=55 // pred_check
            %p3029 = pneg %p3028
          $region58: #{tpu_custom_call.1} parent=55 // pred_check_branch
            %3031 = sbr.rel (%p3029) target = $region60
          $region59: #{tpu_custom_call.1} parent=55 // pred_region
            %v3032 = vld [vmem:[#allocation5] sm:$0xff]
            %v3033 = vld [vmem:[#allocation5 + $0x8] sm:$0xff]
            %v3034 = vld [vmem:[%s4] sm:$0xff]
            %3036 = vset.pattern.permute.xlu0 0
            %3037 = vperm.xlu0 %3036, %v3034
            %v3038 = vpop.permute.xlu0 %3037
            %v3040 = vadd.f32 %v3032, %v3038
            %v3041 = vadd.f32 %v3033, %v3038
            %v3042 = vld [vmem:[%s459] sm:$0xff]
            %v3043 = vld [vmem:[%s459 + $0x8] sm:$0xff]
            %v3044 = vadd.f32 %v3040, %v3042
            %v3045 = vadd.f32 %v3041, %v3043
            %3046 = vst [vmem:[%s404] sm:$0xff] %v3044
            %3047 = vst [vmem:[%s404 + $0x8] sm:$0xff] %v3045
          $region60: #{tpu_custom_call.1} parent=55 // pred_fallthru
            _
        $region56: #{tpu_custom_call.1} parent=43 // pred_fallthru
          _
        %s3048 = sand.u32 %s221, 1
        %s3049 = scalar_lea.sflag [#allocation7], %s3048
        %s3050 = sand.u32 %s221, 1
        %s3051 = smul.addr %s3050, 16
        %s3052 = scalar_lea.vmem [#allocation6], %s3051
        // Predicated region
        $region61: #{tpu_custom_call.1} parent=43 // pred_check
          %p3053 = pneg %p231
        $region62: #{tpu_custom_call.1} parent=43 // pred_check_branch
          %3055 = sbr.rel (%p3053) target = $region64
        $region63: #{tpu_custom_call.1} parent=43 // pred_region
          %s3056 = smul.u32 2, %s27
          %s3058 = ssub.s32 256, 256
          %3059 = vsyncadd %s3049, %s3058
          %s3060 = smul.addr %s26, 2
          %s3061 = sadd.s32 %s3056, %s3060
          %s3062 = smul.addr %s3061, 128
          %s3063 = scalar_lea.hbm %s6, %s3062
          %s3065 = sshll.u32 %s3052, 4
          %s3066 = int_to_ptr.vmem [resolvable:$true] %s3065
          %3068 = dma.vmem_to_hbm [thread:$0]  %s3066, 256, %s3063, %s3049
        $region64: #{tpu_custom_call.1} parent=43 // pred_fallthru
          _
      $region44: #{tpu_custom_call.1} parent=5 // pred_fallthru
        _
      %p3069 = scmp.le.s32.totalorder 2, %s15
      // Predicated region
      $region65: #{tpu_custom_call.1} parent=5 // pred_check
        %p3070 = pneg %p3069
      $region66: #{tpu_custom_call.1} parent=5 // pred_check_branch
        %3072 = sbr.rel (%p3070) target = $region68
      $region67: #{tpu_custom_call.1} parent=5 // pred_region
        %s3073 = ssub.s32 %s15, 2
        // Predicated region
        $region69: #{tpu_custom_call.1} parent=67 // pred_check
          %p3074 = pneg %p237
        $region70: #{tpu_custom_call.1} parent=67 // pred_check_branch
          %3076 = sbr.rel (%p3074) target = $region72
        $region71: #{tpu_custom_call.1} parent=67 // pred_region
          %s3077 = sand.u32 %s222, 1
          %s3078 = scalar_lea.sflag [#allocation7], %s3077
          %s3079 = sand.u32 %s222, 1
          %s3080 = smul.addr %s3079, 16
          %s3081 = scalar_lea.vmem [#allocation6], %s3080
          %3082 = dma.done %s3078, 256
        $region72: #{tpu_custom_call.1} parent=67 // pred_fallthru
          _
      $region68: #{tpu_custom_call.1} parent=5 // pred_fallthru
        _
    $region6: #{tpu_custom_call.1} parent=1 // loop_footer
      %s19 = sadd.s32 1, %s15
    $region7: #{tpu_custom_call.1} parent=1 // loop_footer_branch
      %14 = sbr.rel target = $region3
    $region8: #{tpu_custom_call.1} parent=1 // loop_exit
      _
    %3083 = vsyncpa [#allocation7], 1
    %s3084 = scalar_lea.sflag [#allocation7], 1
    %3085 = vsyncpa %s3084, 1

</llo_original>
